<compile_context>
chip_gen: v7x
topology: tpu7x:2x2x1
jax: 0.10.0
libtpu: 0.0.40
codegen_flags: <defaults>
</compile_context>

<pallas_src>
import functools
import inspect
import math

import jax
import jax.numpy as jnp
from jax import lax
from jax.experimental import pallas as pl
from jax.experimental.pallas import tpu as pltpu


# ----------------------------------------------------------------------------- feature probes

@functools.lru_cache(maxsize=None)
def _single_buffer_supported():
    """Explicit functional probe: does this jax build accept pl.Buffered(1) on a
    constant-index (resident) input BlockSpec?  Probing a tiny dedicated kernel keeps
    the check explicit and cannot mask lowering errors in the real decoder kernel."""
    if not hasattr(pl, "Buffered"):
        return False
    try:
        if "pipeline_mode" not in inspect.signature(pl.BlockSpec).parameters:
            return False
    except (TypeError, ValueError):
        return False

    def _probe(w_ref, o_ref):
        o_ref[...] = w_ref[...] * 2.0

    try:
        w = jnp.ones((8, 128), jnp.float32)
        out = pl.pallas_call(
            _probe,
            out_shape=jax.ShapeDtypeStruct((16, 128), jnp.float32),
            grid=(2,),
            in_specs=[pl.BlockSpec((8, 128), lambda i: (0, 0),
                                   pipeline_mode=pl.Buffered(1))],
            out_specs=pl.BlockSpec((8, 128), lambda i: (i, 0)),
        )(w)
        jax.block_until_ready(out)
        return True
    except Exception:      # probe-only scope; the real kernel is never wrapped
        return False


def _vmem_limit_bytes():
    """Per-generation VMEM limit with headroom for compiler scratch/spills:
    ~48 MiB on v7x (64 MiB physical/TC), ~104 MiB on v5e/v6e (128 MiB physical)."""
    cap = 128 << 20
    if hasattr(pltpu, "get_tpu_info"):
        try:
            info = pltpu.get_tpu_info()
            cap = int(getattr(info, "vmem_capacity_bytes", cap) or cap)
        except Exception:  # hardware query unavailable -> conservative default
            pass
    return max(32 << 20, min(cap - (16 << 20), (cap * 13) // 16))


# ----------------------------------------------------------------------------- kernel

def decoder_layer_kernel(x_ref, wqkv_ref, wp_ref, bp_ref,
                         g1_ref, be1_ref, w1_ref, b1_ref, w2_ref, b2_ref,
                         g2_ref, be2_ref, out_ref, wei_ref,
                         *, n_head, flatten_wei, eps=1e-5):
    bb, T, C = x_ref.shape                 # bb batch rows per grid step
    hs = C // n_head
    M = bb * T                             # large MXU M dim for proj / FFN matmuls

    x = x_ref[...].reshape(M, C)           # f32 (kept for the residual path)
    x_bf = x.astype(jnp.bfloat16)

    # Fused q/k/v projection: one LHS pass, N = 3C.  (1/sqrt(hs) folded into q-columns.)
    qkv = jnp.dot(x_bf, wqkv_ref[...], preferred_element_type=jnp.float32)   # (M, 3C)

    def split_heads(a):                    # (M, C) f32 -> (H*bb, T, hs) bf16, head-major
        a = a.astype(jnp.bfloat16).reshape(M, n_head, hs)
        a = jnp.transpose(a, (1, 0, 2))    # lane (minor) dim hs untouched
        return a.reshape(n_head * bb, T, hs)

    qz = split_heads(qkv[:, :C])
    kz = split_heads(qkv[:, C:2 * C])
    vz = split_heads(qkv[:, 2 * C:])

    # All heads and batch rows of this block in one batched contraction: (H*bb, T, T).
    # TODO(synk): for T >~ 1K tile over (q_block, kv_block) with a causal skip to bound
    # this f32 score scratch and halve the QK^T / exp work (fits v7x's 64 MiB VMEM).
    s = jnp.einsum('zqd,zkd->zqk', qz, kz, preferred_element_type=jnp.float32)

    row = lax.broadcasted_iota(jnp.int32, (T, T), 0)
    col = lax.broadcasted_iota(jnp.int32, (T, T), 1)
    s = jnp.where((col <= row)[None], s, -jnp.inf)            # causal (tril) mask

    s = s - jnp.max(s, axis=-1, keepdims=True)                # stable softmax, f32 stats
    p = jnp.exp(s)
    denom = jnp.sum(p, axis=-1, keepdims=True)
    r = pl.reciprocal(denom, approx=True)                     # EUP slot
    r = r * (2.0 - denom * r)                                 # one Newton step -> ~f32 exact
    p = p * r

    # Attention-weights writeback, head-major (per-head host split = leading-axis view).
    wei = p.astype(wei_ref.dtype)
    if flatten_wei:
        wei_ref[...] = wei.reshape(n_head, bb, T * T)         # lane-dense store
    else:
        wei_ref[...] = wei.reshape(n_head, bb, T, T)

    ctx = jnp.einsum('zqk,zkd->zqd', p.astype(jnp.bfloat16), vz,
                     preferred_element_type=jnp.float32)      # (H*bb, T, hs)
    ctx = jnp.transpose(ctx.reshape(n_head, M, hs), (1, 0, 2)).reshape(M, C)

    attn = jnp.dot(ctx.astype(jnp.bfloat16), wp_ref[...],
                   preferred_element_type=jnp.float32) + bp_ref[...]

    # residual + LayerNorm1 (dropout1 p=0.0 -> identity); stats in f32
    src = x + attn
    mu = jnp.mean(src, axis=-1, keepdims=True)
    var = jnp.mean(jnp.square(src - mu), axis=-1, keepdims=True)
    src = (src - mu) * lax.rsqrt(var + eps) * g1_ref[...] + be1_ref[...]

    # FFN: relu(fc1) -> fc2 ; bias + ReLU + bf16 cast fused (no live f32 hidden copy).
    # TODO(synk): for C >= ~1.2K keep w1/w2 in HBM (memory_space=pl.ANY) and tile the 4C
    # hidden dim (pltpu.emit_pipeline) so FFN weights are not fully resident on v7x.
    h1 = jnp.maximum(
        jnp.dot(src.astype(jnp.bfloat16), w1_ref[...],
                preferred_element_type=jnp.float32) + b1_ref[...],
        0.0).astype(jnp.bfloat16)
    h2 = jnp.dot(h1, w2_ref[...], preferred_element_type=jnp.float32) + b2_ref[...]

    # residual + LayerNorm2 (dropout2 identity)
    src = src + h2
    mu = jnp.mean(src, axis=-1, keepdims=True)
    var = jnp.mean(jnp.square(src - mu), axis=-1, keepdims=True)
    src = (src - mu) * lax.rsqrt(var + eps) * g2_ref[...] + be2_ref[...]

    out_ref[...] = src.reshape(bb, T, C)


# ----------------------------------------------------------------------------- block sizing

def _estimate_block_vmem(bb, T, C, n_head, wei_bytes, resident_w_bytes, weight_bufs):
    """Rough per-step VMEM residency (streamed blocks double-buffered + body scratch)."""
    M = bb * T
    blk_x = M * C * 4
    blk_out = M * C * 4
    blk_wei = n_head * bb * T * T * wei_bytes
    streamed = 2 * (blk_x + blk_out + blk_wei)
    scratch = (M * 3 * C * 4                 # fused qkv f32
               + 3 * M * C * 2               # bf16 q/k/v
               + 2 * n_head * bb * T * T * 4  # scores + probs f32
               + M * 4 * C * 6               # FFN hidden (f32 acc + bf16)
               + 4 * M * C * 4)              # residual / LN temporaries
    return streamed + weight_bufs * resident_w_bytes + scratch


def _pick_block_b(B, T, C, n_head, wei_bytes, resident_w_bytes, weight_bufs,
                  vmem_budget, target_rows=1024):
    """Largest divisor bb of B such that
       - the grid keeps >= 2 steps when B >= 2 (v7x megacore sharding + DMA overlap),
       - bb*T stays near the ~512-1024 row block-M target,
       - the estimated VMEM residency fits the budget."""
    best = 1
    for bb in range(1, B + 1):
        if B % bb:
            continue
        if B >= 2 and B // bb < 2:
            continue
        if bb > 1 and bb * T > target_rows:
            continue
        if bb > 1 and _estimate_block_vmem(bb, T, C, n_head, wei_bytes,
                                           resident_w_bytes, weight_bufs) > vmem_budget:
            continue
        best = bb
    return best


# ----------------------------------------------------------------------------- wrapper

def decoder_layer(x, params, n_head, wei_dtype=jnp.bfloat16):
    """x: (B, T, C) float32.
    Returns (out (B,T,C) f32, list of n_head (B,T,T) attention maps in `wei_dtype`).

    Attention weights are stored in bf16 by default: the (H,B,T,T) writeback is the
    dominant HBM stream on v5e/v6e.  Pass wei_dtype=jnp.float32 for exact f32 storage.
    Mixed precision (bf16 MXU operands, f32 accumulation/statistics) is intentional."""
    B, T, C = x.shape
    assert C % n_head == 0
    hs = C // n_head

    (wq, wk, wv, wp, bp, g1, be1, w1, b1, w2, b2, g2, be2) = params
    # Fused (C, 3C) QKV weight, bf16; fold the 1/sqrt(hs) score scale into the q columns.
    wqkv = jnp.concatenate([wq / math.sqrt(hs), wk, wv], axis=1).astype(jnp.bfloat16)
    wp, w1, w2 = (a.astype(jnp.bfloat16) for a in (wp, w1, w2))
    weight_args = (wqkv, wp, bp, g1, be1, w1, b1, w2, b2, g2, be2)

    single_buffer = _single_buffer_supported()
    weight_bufs = 1 if single_buffer else 2
    resident_w_bytes = sum(int(a.size) * a.dtype.itemsize for a in weight_args)
    vmem_limit = _vmem_limit_bytes()
    wei_bytes = jnp.dtype(wei_dtype).itemsize

    bb = _pick_block_b(B, T, C, n_head, wei_bytes, resident_w_bytes, weight_bufs,
                       vmem_budget=vmem_limit)
    grid = (B // bb,)

    # Lane-dense attention-weights layout when T < 128 (avoids masked partial stores);
    # only used when it satisfies the (8,128)/full-dim block constraint.
    flatten_wei = (T < 128) and ((T * T) % 128 == 0) and (bb == B or bb % 8 == 0)

    kernel = functools.partial(decoder_layer_kernel, n_head=n_head,
                               flatten_wei=flatten_wei)

    if flatten_wei:
        wei_shape = (n_head, B, T * T)
        wei_spec = pl.BlockSpec((n_head, bb, T * T), lambda i: (0, i, 0))
    else:
        wei_shape = (n_head, B, T, T)
        wei_spec = pl.BlockSpec((n_head, bb, T, T), lambda i: (0, i, 0, 0))

    out_shape = [jax.ShapeDtypeStruct((B, T, C), jnp.float32),
                 jax.ShapeDtypeStruct(wei_shape, wei_dtype)]
    out_specs = [pl.BlockSpec((bb, T, C), lambda i: (i, 0, 0)), wei_spec]

    def weight_spec(a):
        nd = a.ndim
        if single_buffer:
            # Constant index_map -> resident weights; single buffer halves their VMEM.
            return pl.BlockSpec(a.shape, lambda i, _nd=nd: (0,) * _nd,
                                pipeline_mode=pl.Buffered(1))
        return pl.BlockSpec(a.shape, lambda i, _nd=nd: (0,) * _nd)

    in_specs = [pl.BlockSpec((bb, T, C), lambda i: (i, 0, 0))]
    in_specs += [weight_spec(a) for a in weight_args]

    out, wei = pl.pallas_call(
        kernel,
        out_shape=out_shape,
        grid_spec=pltpu.PrefetchScalarGridSpec(
            num_scalar_prefetch=0,
            grid=grid,
            in_specs=in_specs,
            out_specs=out_specs),
        compiler_params=pltpu.CompilerParams(
            dimension_semantics=("parallel",),
            vmem_limit_bytes=vmem_limit),
    )(x, *weight_args)

    if flatten_wei:
        wei = wei.reshape(n_head, B, T, T)
    return out, [wei[h] for h in range(n_head)]   # per-head leading-axis views


# ----------------------------------------------------------------------------- params / demo

def make_params(key, n_embd, n_head):
    C = n_embd
    ks = jax.random.split(key, 8)
    s = 1.0 / math.sqrt(C)
    wq = jax.random.normal(ks[0], (C, C), jnp.float32) * s      # concat per-head query weights
    wk = jax.random.normal(ks[1], (C, C), jnp.float32) * s      # concat per-head key weights
    wv = jax.random.normal(ks[2], (C, C), jnp.float32) * s      # concat per-head value weights
    wp = jax.random.normal(ks[3], (C, C), jnp.float32) * s      # proj weight
    bp = jax.random.normal(ks[4], (1, C), jnp.float32) * 0.01   # proj bias
    g1 = jnp.ones((1, C), jnp.float32)                          # norm1 gamma
    be1 = jnp.zeros((1, C), jnp.float32)                        # norm1 beta
    w1 = jax.random.normal(ks[5], (C, 4 * C), jnp.float32) * s  # fc1 weight
    b1 = jax.random.normal(ks[6], (1, 4 * C), jnp.float32) * 0.01
    w2 = jax.random.normal(ks[7], (4 * C, C), jnp.float32) * (1.0 / math.sqrt(4 * C))
    b2 = jnp.zeros((1, C), jnp.float32)
    g2 = jnp.ones((1, C), jnp.float32)                          # norm2 gamma
    be2 = jnp.zeros((1, C), jnp.float32)                        # norm2 beta
    return (wq, wk, wv, wp, bp, g1, be1, w1, b1, w2, b2, g2, be2)


if __name__ == "__main__":
    B, T, C, n_head = 2, 8, 32, 4
    key = jax.random.PRNGKey(0)
    kx, kp = jax.random.split(key)
    x = jax.random.normal(kx, (B, T, C), jnp.float32)
    params = make_params(kp, C, n_head)

    out, weights = decoder_layer(x, params, n_head)
    out = jax.block_until_ready(out)
    weights = [jax.block_until_ready(w) for w in weights]

    assert out.shape == (B, T, C)
    assert len(weights) == n_head and weights[0].shape == (B, T, T)
    assert bool(jnp.all(jnp.isfinite(out)))
    # causal softmax rows sum to ~1 (weights stored in bf16)
    row_sums = weights[0].astype(jnp.float32).sum(-1)
    assert bool(jnp.all(jnp.abs(row_sums - 1.0) < 1e-2))
    # strictly-upper-triangle entries are exactly masked out
    assert bool(jnp.all(weights[0][:, 0, 1:].astype(jnp.float32) == 0.0))
    print("KERNEL_OK")
</pallas_src>

<mosaic_0001>
module attributes {stable_mosaic.version = 11 : i64} {
  func.func @_probe(%arg0: i32, %arg1: memref<8x128xf32, #tpu.memory_space<vmem>>, %arg2: memref<8x128xf32, #tpu.memory_space<vmem>>) attributes {dimension_semantics = [#tpu.dimension_semantics<arbitrary>], iteration_bounds = array<i64: 2>, scalar_prefetch = 0 : i64, scratch_operands = 0 : i64, tpu.core_type = #tpu.core_type<tc>, window_params = [{pipeline_mode = #tpu.pipeline_mode<synchronous>, transform_indices = @transform_0, window_bounds = array<i64: 8, 128>}, {transform_indices = @transform_1, window_bounds = array<i64: 8, 128>}]} {
    %c0 = arith.constant 0 : index
    %c0_0 = arith.constant 0 : index
    %0 = vector.load %arg1[%c0, %c0_0] : memref<8x128xf32, #tpu.memory_space<vmem>>, vector<8x128xf32>
    %cst = arith.constant 2.000000e+00 : f32
    %1 = vector.broadcast %cst : f32 to vector<8x128xf32>
    %2 = arith.mulf %0, %1 : vector<8x128xf32>
    %c0_1 = arith.constant 0 : index
    %c0_2 = arith.constant 0 : index
    %3 = vector.load %arg2[%c0_1, %c0_2] : memref<8x128xf32, #tpu.memory_space<vmem>>, vector<8x128xf32>
    tpu.vector_store %arg2[%c0_1, %c0_2], %2 {strides = array<i32>} : memref<8x128xf32, #tpu.memory_space<vmem>>, vector<8x128xf32>,
    return
  }
  func.func @transform_0(%arg0: i32) -> (i32, i32) {
    %c0_i32 = arith.constant 0 : i32
    %c0_i32_0 = arith.constant 0 : i32
    %c0_i32_1 = arith.constant 0 : i32
    return %c0_i32, %c0_i32_0 : i32, i32
  }
  func.func @transform_1(%arg0: i32) -> (i32, i32) {
    %c0_i32 = arith.constant 0 : i32
    %c0_i32_0 = arith.constant 0 : i32
    return %arg0, %c0_i32 : i32, i32
  }
}

module attributes {stable_mosaic.version = 11 : i64} {
  func.func @decoder_layer_kernel(%arg0: i32, %arg1: memref<1x8x32xf32, #tpu.memory_space<vmem>>, %arg2: memref<32x96xbf16, #tpu.memory_space<vmem>>, %arg3: memref<32x32xbf16, #tpu.memory_space<vmem>>, %arg4: memref<1x32xf32, #tpu.memory_space<vmem>>, %arg5: memref<1x32xf32, #tpu.memory_space<vmem>>, %arg6: memref<1x32xf32, #tpu.memory_space<vmem>>, %arg7: memref<32x128xbf16, #tpu.memory_space<vmem>>, %arg8: memref<1x128xf32, #tpu.memory_space<vmem>>, %arg9: memref<128x32xbf16, #tpu.memory_space<vmem>>, %arg10: memref<1x32xf32, #tpu.memory_space<vmem>>, %arg11: memref<1x32xf32, #tpu.memory_space<vmem>>, %arg12: memref<1x32xf32, #tpu.memory_space<vmem>>, %arg13: memref<1x8x32xf32, #tpu.memory_space<vmem>>, %arg14: memref<4x1x8x8xbf16, #tpu.memory_space<vmem>>) attributes {dimension_semantics = [#tpu.dimension_semantics<parallel>], iteration_bounds = array<i64: 2>, scalar_prefetch = 0 : i64, scratch_operands = 0 : i64, tpu.core_type = #tpu.core_type<tc>, window_params = [{transform_indices = @transform_0, window_bounds = array<i64: 1, 8, 32>}, {pipeline_mode = #tpu.pipeline_mode<synchronous>, transform_indices = @transform_1, window_bounds = array<i64: 32, 96>}, {pipeline_mode = #tpu.pipeline_mode<synchronous>, transform_indices = @transform_2, window_bounds = array<i64: 32, 32>}, {pipeline_mode = #tpu.pipeline_mode<synchronous>, transform_indices = @transform_3, window_bounds = array<i64: 1, 32>}, {pipeline_mode = #tpu.pipeline_mode<synchronous>, transform_indices = @transform_4, window_bounds = array<i64: 1, 32>}, {pipeline_mode = #tpu.pipeline_mode<synchronous>, transform_indices = @transform_5, window_bounds = array<i64: 1, 32>}, {pipeline_mode = #tpu.pipeline_mode<synchronous>, transform_indices = @transform_6, window_bounds = array<i64: 32, 128>}, {pipeline_mode = #tpu.pipeline_mode<synchronous>, transform_indices = @transform_7, window_bounds = array<i64: 1, 128>}, {pipeline_mode = #tpu.pipeline_mode<synchronous>, transform_indices = @transform_8, window_bounds = array<i64: 128, 32>}, {pipeline_mode = #tpu.pipeline_mode<synchronous>, transform_indices = @transform_9, window_bounds = array<i64: 1, 32>}, {pipeline_mode = #tpu.pipeline_mode<synchronous>, transform_indices = @transform_10, window_bounds = array<i64: 1, 32>}, {pipeline_mode = #tpu.pipeline_mode<synchronous>, transform_indices = @transform_11, window_bounds = array<i64: 1, 32>}, {transform_indices = @transform_12, window_bounds = array<i64: 1, 8, 32>}, {transform_indices = @transform_13, window_bounds = array<i64: 4, 1, 8, 8>}]} {
    %c0 = arith.constant 0 : index
    %c0_0 = arith.constant 0 : index
    %c0_1 = arith.constant 0 : index
    %0 = vector.load %arg1[%c0, %c0_0, %c0_1] : memref<1x8x32xf32, #tpu.memory_space<vmem>>, vector<1x8x32xf32>
    %1 = vector.shape_cast %0 : vector<1x8x32xf32> to vector<8x32xf32>
    %2 = arith.truncf %1 : vector<8x32xf32> to vector<8x32xbf16>
    %c0_2 = arith.constant 0 : index
    %c0_3 = arith.constant 0 : index
    %3 = vector.load %arg2[%c0_2, %c0_3] : memref<32x96xbf16, #tpu.memory_space<vmem>>, vector<32x96xbf16>
    %cst = arith.constant dense<0.000000e+00> : vector<8x96xf32>
    %4 = tpu.matmul %2, %3, %cst {dimension_numbers = #tpu.dot_dimension_numbers<[1], [0], [0], [1], [0, 0, 1, 1], [], []>} : vector<8x32xbf16>, vector<32x96xbf16>, vector<8x96xf32> -> vector<8x96xf32>
    %5 = vector.extract_strided_slice %4 {offsets = [0, 0], sizes = [8, 32], strides = [1, 1]} : vector<8x96xf32> to vector<8x32xf32>
    %6 = arith.truncf %5 : vector<8x32xf32> to vector<8x32xbf16>
    %7 = vector.shape_cast %6 : vector<8x32xbf16> to vector<8x4x8xbf16>
    %8 = tpu.transpose %7, [1, 0, 2] : vector<8x4x8xbf16> -> vector<4x8x8xbf16>
    %9 = vector.extract_strided_slice %4 {offsets = [0, 32], sizes = [8, 32], strides = [1, 1]} : vector<8x96xf32> to vector<8x32xf32>
    %10 = arith.truncf %9 : vector<8x32xf32> to vector<8x32xbf16>
    %11 = vector.shape_cast %10 : vector<8x32xbf16> to vector<8x4x8xbf16>
    %12 = tpu.transpose %11, [1, 0, 2] : vector<8x4x8xbf16> -> vector<4x8x8xbf16>
    %13 = vector.extract_strided_slice %4 {offsets = [0, 64], sizes = [8, 32], strides = [1, 1]} : vector<8x96xf32> to vector<8x32xf32>
    %14 = arith.truncf %13 : vector<8x32xf32> to vector<8x32xbf16>
    %15 = vector.shape_cast %14 : vector<8x32xbf16> to vector<8x4x8xbf16>
    %16 = tpu.transpose %15, [1, 0, 2] : vector<8x4x8xbf16> -> vector<4x8x8xbf16>
    "tpu.trace_start"() <{level = 10 : i32, message = "zqd,zkd->zqk"}> : () -> ()
    %cst_4 = arith.constant dense<0.000000e+00> : vector<4x8x8xf32>
    %17 = tpu.matmul %8, %12, %cst_4 {dimension_numbers = #tpu.dot_dimension_numbers<[2], [2], [1], [1], [0, 0, 0, 1, 1, 1], [0], [0]>} : vector<4x8x8xbf16>, vector<4x8x8xbf16>, vector<4x8x8xf32> -> vector<4x8x8xf32>
    "tpu.trace_stop"() : () -> ()
    %18 = tpu.iota {dimensions = array<i32: 0>} : vector<8x8xi32>
    %19 = tpu.iota {dimensions = array<i32: 1>} : vector<8x8xi32>
    %20 = arith.cmpi sle, %19, %18 : vector<8x8xi32>
    %21 = vector.shape_cast %20 : vector<8x8xi1> to vector<1x8x8xi1>
    %cst_5 = arith.constant 0xFF800000 : f32
    %22 = vector.shape_cast %21 : vector<1x8x8xi1> to vector<1x8x8xi1>
    %23 = vector.broadcast %22 : vector<1x8x8xi1> to vector<4x8x8xi1>
    %24 = vector.broadcast %cst_5 : f32 to vector<4x8x8xf32>
    %25 = arith.select %23, %17, %24 : vector<4x8x8xi1>, vector<4x8x8xf32>
    %cst_6 = arith.constant dense<0xFF800000> : vector<4x8xf32>
    %26 = vector.multi_reduction <maximumf>, %25, %cst_6 [2] : vector<4x8x8xf32> to vector<4x8xf32>
    %27 = vector.shape_cast %26 : vector<4x8xf32> to vector<4x8x1xf32>
    %28 = vector.broadcast %27 : vector<4x8x1xf32> to vector<4x8x8xf32>
    %29 = arith.subf %25, %28 : vector<4x8x8xf32>
    %30 = math.exp %29 : vector<4x8x8xf32>
    %cst_7 = arith.constant dense<0.000000e+00> : vector<4x8xf32>
    %31 = vector.multi_reduction <add>, %30, %cst_7 [2] : vector<4x8x8xf32> to vector<4x8xf32>
    %32 = vector.shape_cast %31 : vector<4x8xf32> to vector<4x8x1xf32>
    %33 = tpu.reciprocal %32 {approx = true} : vector<4x8x1xf32> -> vector<4x8x1xf32>
    %34 = arith.mulf %32, %33 : vector<4x8x1xf32>
    %cst_8 = arith.constant 2.000000e+00 : f32
    %35 = vector.broadcast %cst_8 : f32 to vector<4x8x1xf32>
    %36 = arith.subf %35, %34 : vector<4x8x1xf32>
    %37 = arith.mulf %33, %36 : vector<4x8x1xf32>
    %38 = vector.broadcast %37 : vector<4x8x1xf32> to vector<4x8x8xf32>
    %39 = arith.mulf %30, %38 : vector<4x8x8xf32>
    %40 = arith.truncf %39 : vector<4x8x8xf32> to vector<4x8x8xbf16>
    %41 = vector.shape_cast %40 : vector<4x8x8xbf16> to vector<4x1x8x8xbf16>
    %c0_9 = arith.constant 0 : index
    %c0_10 = arith.constant 0 : index
    %c0_11 = arith.constant 0 : index
    %c0_12 = arith.constant 0 : index
    %42 = vector.load %arg14[%c0_9, %c0_10, %c0_11, %c0_12] : memref<4x1x8x8xbf16, #tpu.memory_space<vmem>>, vector<4x1x8x8xbf16>
    tpu.vector_store %arg14[%c0_9, %c0_10, %c0_11, %c0_12], %41 {strides = array<i32>} : memref<4x1x8x8xbf16, #tpu.memory_space<vmem>>, vector<4x1x8x8xbf16>,
    %43 = arith.truncf %39 : vector<4x8x8xf32> to vector<4x8x8xbf16>
    "tpu.trace_start"() <{level = 10 : i32, message = "zqk,zkd->zqd"}> : () -> ()
    %cst_13 = arith.constant dense<0.000000e+00> : vector<4x8x8xf32>
    %44 = tpu.matmul %43, %16, %cst_13 {dimension_numbers = #tpu.dot_dimension_numbers<[2], [1], [1], [2], [0, 0, 0, 1, 1, 2], [0], [0]>} : vector<4x8x8xbf16>, vector<4x8x8xbf16>, vector<4x8x8xf32> -> vector<4x8x8xf32>
    "tpu.trace_stop"() : () -> ()
    %45 = tpu.transpose %44, [1, 0, 2] : vector<4x8x8xf32> -> vector<8x4x8xf32>
    %46 = vector.shape_cast %45 : vector<8x4x8xf32> to vector<8x32xf32>
    %47 = arith.truncf %46 : vector<8x32xf32> to vector<8x32xbf16>
    %c0_14 = arith.constant 0 : index
    %c0_15 = arith.constant 0 : index
    %48 = vector.load %arg3[%c0_14, %c0_15] : memref<32x32xbf16, #tpu.memory_space<vmem>>, vector<32x32xbf16>
    %cst_16 = arith.constant dense<0.000000e+00> : vector<8x32xf32>
    %49 = tpu.matmul %47, %48, %cst_16 {dimension_numbers = #tpu.dot_dimension_numbers<[1], [0], [0], [1], [0, 0, 1, 1], [], []>} : vector<8x32xbf16>, vector<32x32xbf16>, vector<8x32xf32> -> vector<8x32xf32>
    %c0_17 = arith.constant 0 : index
    %c0_18 = arith.constant 0 : index
    %50 = vector.load %arg4[%c0_17, %c0_18] : memref<1x32xf32, #tpu.memory_space<vmem>>, vector<1x32xf32>
    %51 = vector.broadcast %50 : vector<1x32xf32> to vector<8x32xf32>
    %52 = arith.addf %49, %51 : vector<8x32xf32>
    %53 = arith.addf %1, %52 : vector<8x32xf32>
    %cst_19 = arith.constant dense<0.000000e+00> : vector<8xf32>
    %54 = vector.multi_reduction <add>, %53, %cst_19 [1] : vector<8x32xf32> to vector<8xf32>
    %55 = vector.shape_cast %54 : vector<8xf32> to vector<8x1xf32>
    %cst_20 = arith.constant 3.200000e+01 : f32
    %56 = vector.broadcast %cst_20 : f32 to vector<8x1xf32>
    %57 = arith.divf %55, %56 : vector<8x1xf32>
    %58 = vector.broadcast %57 : vector<8x1xf32> to vector<8x32xf32>
    %59 = arith.subf %53, %58 : vector<8x32xf32>
    %60 = arith.mulf %59, %59 : vector<8x32xf32>
    %cst_21 = arith.constant dense<0.000000e+00> : vector<8xf32>
    %61 = vector.multi_reduction <add>, %60, %cst_21 [1] : vector<8x32xf32> to vector<8xf32>
    %62 = vector.shape_cast %61 : vector<8xf32> to vector<8x1xf32>
    %cst_22 = arith.constant 3.200000e+01 : f32
    %63 = vector.broadcast %cst_22 : f32 to vector<8x1xf32>
    %64 = arith.divf %62, %63 : vector<8x1xf32>
    %65 = vector.broadcast %57 : vector<8x1xf32> to vector<8x32xf32>
    %66 = arith.subf %53, %65 : vector<8x32xf32>
    %cst_23 = arith.constant 9.99999974E-6 : f32
    %67 = vector.broadcast %cst_23 : f32 to vector<8x1xf32>
    %68 = arith.addf %64, %67 : vector<8x1xf32>
    %69 = math.rsqrt %68 : vector<8x1xf32>
    %70 = vector.broadcast %69 : vector<8x1xf32> to vector<8x32xf32>
    %71 = arith.mulf %66, %70 : vector<8x32xf32>
    %c0_24 = arith.constant 0 : index
    %c0_25 = arith.constant 0 : index
    %72 = vector.load %arg5[%c0_24, %c0_25] : memref<1x32xf32, #tpu.memory_space<vmem>>, vector<1x32xf32>
    %73 = vector.broadcast %72 : vector<1x32xf32> to vector<8x32xf32>
    %74 = arith.mulf %71, %73 : vector<8x32xf32>
    %c0_26 = arith.constant 0 : index
    %c0_27 = arith.constant 0 : index
    %75 = vector.load %arg6[%c0_26, %c0_27] : memref<1x32xf32, #tpu.memory_space<vmem>>, vector<1x32xf32>
    %76 = vector.broadcast %75 : vector<1x32xf32> to vector<8x32xf32>
    %77 = arith.addf %74, %76 : vector<8x32xf32>
    %78 = arith.truncf %77 : vector<8x32xf32> to vector<8x32xbf16>
    %c0_28 = arith.constant 0 : index
    %c0_29 = arith.constant 0 : index
    %79 = vector.load %arg7[%c0_28, %c0_29] : memref<32x128xbf16, #tpu.memory_space<vmem>>, vector<32x128xbf16>
    %cst_30 = arith.constant dense<0.000000e+00> : vector<8x128xf32>
    %80 = tpu.matmul %78, %79, %cst_30 {dimension_numbers = #tpu.dot_dimension_numbers<[1], [0], [0], [1], [0, 0, 1, 1], [], []>} : vector<8x32xbf16>, vector<32x128xbf16>, vector<8x128xf32> -> vector<8x128xf32>
    %c0_31 = arith.constant 0 : index
    %c0_32 = arith.constant 0 : index
    %81 = vector.load %arg8[%c0_31, %c0_32] : memref<1x128xf32, #tpu.memory_space<vmem>>, vector<1x128xf32>
    %82 = vector.broadcast %81 : vector<1x128xf32> to vector<8x128xf32>
    %83 = arith.addf %80, %82 : vector<8x128xf32>
    %cst_33 = arith.constant 0.000000e+00 : f32
    %84 = vector.broadcast %cst_33 : f32 to vector<8x128xf32>
    %85 = arith.maximumf %83, %84 : vector<8x128xf32>
    %86 = arith.truncf %85 : vector<8x128xf32> to vector<8x128xbf16>
    %c0_34 = arith.constant 0 : index
    %c0_35 = arith.constant 0 : index
    %87 = vector.load %arg9[%c0_34, %c0_35] : memref<128x32xbf16, #tpu.memory_space<vmem>>, vector<128x32xbf16>
    %cst_36 = arith.constant dense<0.000000e+00> : vector<8x32xf32>
    %88 = tpu.matmul %86, %87, %cst_36 {dimension_numbers = #tpu.dot_dimension_numbers<[1], [0], [0], [1], [0, 0, 1, 1], [], []>} : vector<8x128xbf16>, vector<128x32xbf16>, vector<8x32xf32> -> vector<8x32xf32>
    %c0_37 = arith.constant 0 : index
    %c0_38 = arith.constant 0 : index
    %89 = vector.load %arg10[%c0_37, %c0_38] : memref<1x32xf32, #tpu.memory_space<vmem>>, vector<1x32xf32>
    %90 = vector.broadcast %89 : vector<1x32xf32> to vector<8x32xf32>
    %91 = arith.addf %88, %90 : vector<8x32xf32>
    %92 = arith.addf %77, %91 : vector<8x32xf32>
    %cst_39 = arith.constant dense<0.000000e+00> : vector<8xf32>
    %93 = vector.multi_reduction <add>, %92, %cst_39 [1] : vector<8x32xf32> to vector<8xf32>
    %94 = vector.shape_cast %93 : vector<8xf32> to vector<8x1xf32>
    %cst_40 = arith.constant 3.200000e+01 : f32
    %95 = vector.broadcast %cst_40 : f32 to vector<8x1xf32>
    %96 = arith.divf %94, %95 : vector<8x1xf32>
    %97 = vector.broadcast %96 : vector<8x1xf32> to vector<8x32xf32>
    %98 = arith.subf %92, %97 : vector<8x32xf32>
    %99 = arith.mulf %98, %98 : vector<8x32xf32>
    %cst_41 = arith.constant dense<0.000000e+00> : vector<8xf32>
    %100 = vector.multi_reduction <add>, %99, %cst_41 [1] : vector<8x32xf32> to vector<8xf32>
    %101 = vector.shape_cast %100 : vector<8xf32> to vector<8x1xf32>
    %cst_42 = arith.constant 3.200000e+01 : f32
    %102 = vector.broadcast %cst_42 : f32 to vector<8x1xf32>
    %103 = arith.divf %101, %102 : vector<8x1xf32>
    %104 = vector.broadcast %96 : vector<8x1xf32> to vector<8x32xf32>
    %105 = arith.subf %92, %104 : vector<8x32xf32>
    %cst_43 = arith.constant 9.99999974E-6 : f32
    %106 = vector.broadcast %cst_43 : f32 to vector<8x1xf32>
    %107 = arith.addf %103, %106 : vector<8x1xf32>
    %108 = math.rsqrt %107 : vector<8x1xf32>
    %109 = vector.broadcast %108 : vector<8x1xf32> to vector<8x32xf32>
    %110 = arith.mulf %105, %109 : vector<8x32xf32>
    %c0_44 = arith.constant 0 : index
    %c0_45 = arith.constant 0 : index
    %111 = vector.load %arg11[%c0_44, %c0_45] : memref<1x32xf32, #tpu.memory_space<vmem>>, vector<1x32xf32>
    %112 = vector.broadcast %111 : vector<1x32xf32> to vector<8x32xf32>
    %113 = arith.mulf %110, %112 : vector<8x32xf32>
    %c0_46 = arith.constant 0 : index
    %c0_47 = arith.constant 0 : index
    %114 = vector.load %arg12[%c0_46, %c0_47] : memref<1x32xf32, #tpu.memory_space<vmem>>, vector<1x32xf32>
    %115 = vector.broadcast %114 : vector<1x32xf32> to vector<8x32xf32>
    %116 = arith.addf %113, %115 : vector<8x32xf32>
    %117 = vector.shape_cast %116 : vector<8x32xf32> to vector<1x8x32xf32>
    %c0_48 = arith.constant 0 : index
    %c0_49 = arith.constant 0 : index
    %c0_50 = arith.constant 0 : index
    %118 = vector.load %arg13[%c0_48, %c0_49, %c0_50] : memref<1x8x32xf32, #tpu.memory_space<vmem>>, vector<1x8x32xf32>
    tpu.vector_store %arg13[%c0_48, %c0_49, %c0_50], %117 {strides = array<i32>} : memref<1x8x32xf32, #tpu.memory_space<vmem>>, vector<1x8x32xf32>,
    return
  }
  func.func @transform_0(%arg0: i32) -> (i32, i32, i32) {
    %c0_i32 = arith.constant 0 : i32
    %c0_i32_0 = arith.constant 0 : i32
    %c0_i32_1 = arith.constant 0 : i32
    return %arg0, %c0_i32, %c0_i32_0 : i32, i32, i32
  }
  func.func @transform_1(%arg0: i32) -> (i32, i32) {
    %c0_i32 = arith.constant 0 : i32
    %c0_i32_0 = arith.constant 0 : i32
    %c0_i32_1 = arith.constant 0 : i32
    return %c0_i32, %c0_i32_0 : i32, i32
  }
  func.func @transform_2(%arg0: i32) -> (i32, i32) {
    %c0_i32 = arith.constant 0 : i32
    %c0_i32_0 = arith.constant 0 : i32
    %c0_i32_1 = arith.constant 0 : i32
    return %c0_i32, %c0_i32_0 : i32, i32
  }
  func.func @transform_3(%arg0: i32) -> (i32, i32) {
    %c0_i32 = arith.constant 0 : i32
    %c0_i32_0 = arith.constant 0 : i32
    %c0_i32_1 = arith.constant 0 : i32
    return %c0_i32, %c0_i32_0 : i32, i32
  }
  func.func @transform_4(%arg0: i32) -> (i32, i32) {
    %c0_i32 = arith.constant 0 : i32
    %c0_i32_0 = arith.constant 0 : i32
    %c0_i32_1 = arith.constant 0 : i32
    return %c0_i32, %c0_i32_0 : i32, i32
  }
  func.func @transform_5(%arg0: i32) -> (i32, i32) {
    %c0_i32 = arith.constant 0 : i32
    %c0_i32_0 = arith.constant 0 : i32
    %c0_i32_1 = arith.constant 0 : i32
    return %c0_i32, %c0_i32_0 : i32, i32
  }
  func.func @transform_6(%arg0: i32) -> (i32, i32) {
    %c0_i32 = arith.constant 0 : i32
    %c0_i32_0 = arith.constant 0 : i32
    %c0_i32_1 = arith.constant 0 : i32
    return %c0_i32, %c0_i32_0 : i32, i32
  }
  func.func @transform_7(%arg0: i32) -> (i32, i32) {
    %c0_i32 = arith.constant 0 : i32
    %c0_i32_0 = arith.constant 0 : i32
    %c0_i32_1 = arith.constant 0 : i32
    return %c0_i32, %c0_i32_0 : i32, i32
  }
  func.func @transform_8(%arg0: i32) -> (i32, i32) {
    %c0_i32 = arith.constant 0 : i32
    %c0_i32_0 = arith.constant 0 : i32
    %c0_i32_1 = arith.constant 0 : i32
    return %c0_i32, %c0_i32_0 : i32, i32
  }
  func.func @transform_9(%arg0: i32) -> (i32, i32) {
    %c0_i32 = arith.constant 0 : i32
    %c0_i32_0 = arith.constant 0 : i32
    %c0_i32_1 = arith.constant 0 : i32
    return %c0_i32, %c0_i32_0 : i32, i32
  }
  func.func @transform_10(%arg0: i32) -> (i32, i32) {
    %c0_i32 = arith.constant 0 : i32
    %c0_i32_0 = arith.constant 0 : i32
    %c0_i32_1 = arith.constant 0 : i32
    return %c0_i32, %c0_i32_0 : i32, i32
  }
  func.func @transform_11(%arg0: i32) -> (i32, i32) {
    %c0_i32 = arith.constant 0 : i32
    %c0_i32_0 = arith.constant 0 : i32
    %c0_i32_1 = arith.constant 0 : i32
    return %c0_i32, %c0_i32_0 : i32, i32
  }
  func.func @transform_12(%arg0: i32) -> (i32, i32, i32) {
    %c0_i32 = arith.constant 0 : i32
    %c0_i32_0 = arith.constant 0 : i32
    %c0_i32_1 = arith.constant 0 : i32
    return %arg0, %c0_i32, %c0_i32_0 : i32, i32, i32
  }
  func.func @transform_13(%arg0: i32) -> (i32, i32, i32, i32) {
    %c0_i32 = arith.constant 0 : i32
    %c0_i32_0 = arith.constant 0 : i32
    %c0_i32_1 = arith.constant 0 : i32
    %c0_i32_2 = arith.constant 0 : i32
    return %c0_i32, %arg0, %c0_i32_0, %c0_i32_1 : i32, i32, i32, i32
  }
}

</mosaic_0001>

<llo_original>
// kernel: tpu_custom_call.1
$region0: #{tpu_custom_call.1}
  #allocation0 [shape = 'u32[]', space=smem, size = 0x4, offset = 0x4, fixed_abs, tag = 'smem constant byte address 0x4 - core index']
  #allocation1 [shape = 'u32[144,128]{1,0:T(1,128)}', space=vmem, size = 0x12000, scoped, tag = 'internal scratch']
  %s0 = inlined_call_operand.hbm [shape: f32[8,128], index: 0, kind: input, shape index: {}]
  %s1 = inlined_call_operand.hbm [shape: f32[16,128], index: 1, kind: output, shape index: {}]
  %s2 = sld [smem:[#allocation0]]
  $region41: #{tpu_custom_call.1} parent=0
    _
  %s4 = ssub.s32 1, %s2
  %s5 = scalar_select 0, %s4, %s2
  $region1: #{tpu_custom_call.1} parent=0
    #allocation2 [shape = 'u8[4096]{0}', space=vmem, size = 0x1000, scoped, tag = 'input window, operand 0, single buffered']
    #allocation3 [shape = 's32[2]{0}', space=sflag, size = 0x8, scoped, tag = 'scoped memory for tpu_custom_call.1']
    #allocation4 [shape = 's32[2]{0}', space=sflag, size = 0x8, scoped, tag = 'scoped memory for tpu_custom_call.1']
    #allocation5 [shape = 'u8[8192]{0}', space=vmem, size = 0x2000, scoped, tag = 'output window, operand 0']
    %6 = vsyncpa [#allocation3], 0
    %7 = vsyncpa [#allocation4], 0
    %s8 = scalar_lea.sflag [#allocation4], 1
    %9 = vsyncpa %s8, 0
    loop: start=0, step=1, limit=4
    $region2: #{tpu_custom_call.1} parent=1 // loop_pre_header
      _
    $region3: #{tpu_custom_call.1} parent=1 // loop_header
      %s11 = sphi 0, %s15
      %p12 = scmp.ge.s32.totalorder %s11, 4
      %s19 = sphi 0, %s19
      %s21 = sphi 0, %s19
      %s22 = sphi 0, %s21
      %s36 = sphi 0, %s22
      %s42 = sphi 0, %s44
      %s45 = sphi 0, %s42
      %s46 = sphi 0, %s45
      %s62 = sphi 0, %s46
    $region4: #{tpu_custom_call.1} parent=1 // loop_header_branch
      %14 = sbr.rel (%p12) target = $region8
    $region5: #{tpu_custom_call.1} parent=1 // loop_body
      %s16 = ssub.s32 %s11, 1
      %s17 = ssub.s32 %s11, 2
      %s18 = sadd.s32 %s11, 1
      %s20 = sadd.s32 %s19, 1
      %p23 = scmp.eq.s32.totalorder %s11, 1
      %p24 = scmp.ne.s32.totalorder %s19, %s21
      %p25 = scmp.eq.s32.totalorder %s11, 0
      %p26 = por %p24, %p25
      %p27 = scmp.ne.s32.totalorder %s19, %s21
      %p28 = scmp.eq.s32.totalorder %s16, 1
      %p29 = por %p27, %p28
      %p30 = scmp.ne.s32.totalorder %s21, %s22
      %p31 = scmp.eq.s32.totalorder %s16, 0
      %p32 = por %p30, %p31
      %p33 = scmp.ne.s32.totalorder %s21, %s22
      %p34 = scmp.eq.s32.totalorder %s17, 1
      %p35 = por %p33, %p34
      %p37 = scmp.ne.s32.totalorder %s22, %s36
      %p38 = scmp.eq.s32.totalorder %s17, 0
      %p39 = por %p37, %p38
      %s40 = ssub.s32 %s11, %s18
      %p41 = scmp.eq.s32.totalorder %s40, 0
      %s43 = sadd.s32 %s42, 1
      %s44 = scalar_select %p41, %s42, %s43
      %p47 = pneg %p41
      %p48 = scmp.eq.s32.totalorder %s11, 1
      %p49 = por %p47, %p48
      %p50 = scmp.ne.s32.totalorder %s42, %s45
      %p51 = scmp.eq.s32.totalorder %s11, 0
      %p52 = por %p50, %p51
      %p53 = scmp.ne.s32.totalorder %s42, %s45
      %p54 = scmp.eq.s32.totalorder %s16, 1
      %p55 = por %p53, %p54
      %p56 = scmp.ne.s32.totalorder %s45, %s46
      %p57 = scmp.eq.s32.totalorder %s16, 0
      %p58 = por %p56, %p57
      %p59 = scmp.ne.s32.totalorder %s45, %s46
      %p60 = scmp.eq.s32.totalorder %s17, 1
      %p61 = por %p59, %p60
      %p63 = scmp.ne.s32.totalorder %s46, %s62
      %p64 = scmp.eq.s32.totalorder %s17, 0
      %p65 = por %p63, %p64
      %p66 = scmp.le.s32.totalorder 1, %s11
      %p67 = scmp.lt.s32.totalorder %s11, 3
      %p68 = pnand %p66, %p67
      %p69 = pneg %p68
      // Predicated region
      $region9: #{tpu_custom_call.1} parent=5 // pred_check
        _
      $region10: #{tpu_custom_call.1} parent=5 // pred_check_branch
        %71 = sbr.rel (%p68) target = $region12
      $region11: #{tpu_custom_call.1} parent=5 // pred_region
        %s72 = ssub.s32 %s11, 1
        // Predicated region
        $region13: #{tpu_custom_call.1} parent=11 // pred_check
          %p73 = pneg %p32
        $region14: #{tpu_custom_call.1} parent=11 // pred_check_branch
          %75 = sbr.rel (%p73) target = $region16
        $region15: #{tpu_custom_call.1} parent=11 // pred_region
          %s77 = ssub.s32 128, 128
          %78 = vsyncadd [#allocation3], %s77
          %s80 = sshll.u32 [#allocation2], 4
          %s81 = int_to_ptr.vmem [resolvable:$true] %s80
          %83 = dma.hbm_to_vmem [thread:$0]  %s0, 128, %s81, [#allocation3]
        $region16: #{tpu_custom_call.1} parent=11 // pred_fallthru
          _
      $region12: #{tpu_custom_call.1} parent=5 // pred_fallthru
        _
      %p84 = scmp.lt.s32.totalorder %s11, 2
      // Predicated region
      $region17: #{tpu_custom_call.1} parent=5 // pred_check
        %p85 = pneg %p84
      $region18: #{tpu_custom_call.1} parent=5 // pred_check_branch
        %87 = sbr.rel (%p85) target = $region20
      $region19: #{tpu_custom_call.1} parent=5 // pred_region
        _
      $region20: #{tpu_custom_call.1} parent=5 // pred_fallthru
        _
      %p88 = scmp.le.s32.totalorder 1, %s11
      %p89 = scmp.lt.s32.totalorder %s11, 3
      %p90 = pnand %p88, %p89
      %p91 = pneg %p90
      // Predicated region
      $region21: #{tpu_custom_call.1} parent=5 // pred_check
        _
      $region22: #{tpu_custom_call.1} parent=5 // pred_check_branch
        %93 = sbr.rel (%p90) target = $region24
      $region23: #{tpu_custom_call.1} parent=5 // pred_region
        %s94 = ssub.s32 %s11, 1
        // Predicated region
        $region25: #{tpu_custom_call.1} parent=23 // pred_check
          %p95 = pneg %p32
        $region26: #{tpu_custom_call.1} parent=23 // pred_check_branch
          %97 = sbr.rel (%p95) target = $region28
        $region27: #{tpu_custom_call.1} parent=23 // pred_region
          %98 = dma.done [#allocation3], 128
        $region28: #{tpu_custom_call.1} parent=23 // pred_fallthru
          _
        %p99 = pneg %p32
        %p100 = pneg %p29
        %p101 = pneg %p58
        %p102 = pneg %p55
        %s103 = sand.u32 %s45, 1
        %s104 = scalar_lea.sflag [#allocation4], %s103
        %s105 = sand.u32 %s45, 1
        %s106 = smul.addr %s105, 8
        %s107 = scalar_lea.vmem [#allocation5], %s106
        %v108 = vld [vmem:[#allocation2] sm:$0xff]
        %v109 = vmul.f32 %v108, 2.0
        %110 = vst [vmem:[%s107] sm:$0xff] %v109
        %s111 = sand.u32 %s45, 1
        %s112 = scalar_lea.sflag [#allocation4], %s111
        %s113 = sand.u32 %s45, 1
        %s114 = smul.addr %s113, 8
        %s115 = scalar_lea.vmem [#allocation5], %s114
        // Predicated region
        $region29: #{tpu_custom_call.1} parent=23 // pred_check
          %p116 = pneg %p55
        $region30: #{tpu_custom_call.1} parent=23 // pred_check_branch
          %118 = sbr.rel (%p116) target = $region32
        $region31: #{tpu_custom_call.1} parent=23 // pred_region
          %s120 = ssub.s32 128, 128
          %121 = vsyncadd %s112, %s120
          %s122 = smul.addr %s16, 128
          %s123 = scalar_lea.hbm %s1, %s122
          %s125 = sshll.u32 %s115, 4
          %s126 = int_to_ptr.vmem [resolvable:$true] %s125
          %128 = dma.vmem_to_hbm [thread:$0]  %s126, 128, %s123, %s112
        $region32: #{tpu_custom_call.1} parent=23 // pred_fallthru
          _
      $region24: #{tpu_custom_call.1} parent=5 // pred_fallthru
        _
      %p129 = scmp.le.s32.totalorder 2, %s11
      // Predicated region
      $region33: #{tpu_custom_call.1} parent=5 // pred_check
        %p130 = pneg %p129
      $region34: #{tpu_custom_call.1} parent=5 // pred_check_branch
        %132 = sbr.rel (%p130) target = $region36
      $region35: #{tpu_custom_call.1} parent=5 // pred_region
        %s133 = ssub.s32 %s11, 2
        // Predicated region
        $region37: #{tpu_custom_call.1} parent=35 // pred_check
          %p134 = pneg %p61
        $region38: #{tpu_custom_call.1} parent=35 // pred_check_branch
          %136 = sbr.rel (%p134) target = $region40
        $region39: #{tpu_custom_call.1} parent=35 // pred_region
          %s137 = sand.u32 %s46, 1
          %s138 = scalar_lea.sflag [#allocation4], %s137
          %s139 = sand.u32 %s46, 1
          %s140 = smul.addr %s139, 8
          %s141 = scalar_lea.vmem [#allocation5], %s140
          %142 = dma.done %s138, 128
        $region40: #{tpu_custom_call.1} parent=35 // pred_fallthru
          _
      $region36: #{tpu_custom_call.1} parent=5 // pred_fallthru
        _
    $region6: #{tpu_custom_call.1} parent=1 // loop_footer
      %s15 = sadd.s32 1, %s11
    $region7: #{tpu_custom_call.1} parent=1 // loop_footer_branch
      %10 = sbr.rel target = $region3
    $region8: #{tpu_custom_call.1} parent=1 // loop_exit
      _
    %143 = vsyncpa [#allocation3], 1
    %s144 = scalar_lea.sflag [#allocation3], 1
    %145 = vsyncpa %s144, 1
    %146 = vsyncpa [#allocation4], 1
    %s147 = scalar_lea.sflag [#allocation4], 1
    %148 = vsyncpa %s147, 1

// kernel: tpu_custom_call.1
$region0: #{tpu_custom_call.1}
  #allocation0 [shape = 'u32[]', space=smem, size = 0x4, offset = 0x4, fixed_abs, tag = 'smem constant byte address 0x4 - core index']
  #allocation1 [shape = 'u32[144,128]{1,0:T(1,128)}', space=vmem, size = 0x12000, scoped, tag = 'internal scratch']
  %s0 = inlined_call_operand.hbm [shape: f32[2,8,32], index: 0, kind: input, shape index: {}]
  %s1 = inlined_call_operand.hbm [shape: bf16[32,96], index: 1, kind: input, shape index: {}]
  %s2 = inlined_call_operand.hbm [shape: bf16[32,32], index: 2, kind: input, shape index: {}]
  %s3 = inlined_call_operand.hbm [shape: f32[1,32], index: 3, kind: input, shape index: {}]
  %s4 = inlined_call_operand.hbm [shape: f32[1,32], index: 4, kind: input, shape index: {}]
  %s5 = inlined_call_operand.hbm [shape: f32[1,32], index: 5, kind: input, shape index: {}]
  %s6 = inlined_call_operand.hbm [shape: bf16[32,128], index: 6, kind: input, shape index: {}]
  %s7 = inlined_call_operand.hbm [shape: f32[1,128], index: 7, kind: input, shape index: {}]
  %s8 = inlined_call_operand.hbm [shape: bf16[128,32], index: 8, kind: input, shape index: {}]
  %s9 = inlined_call_operand.hbm [shape: f32[1,32], index: 9, kind: input, shape index: {}]
  %s10 = inlined_call_operand.hbm [shape: f32[1,32], index: 10, kind: input, shape index: {}]
  %s11 = inlined_call_operand.hbm [shape: f32[1,32], index: 11, kind: input, shape index: {}]
  %s12 = inlined_call_operand.hbm [shape: f32[2,8,32], index: 12, kind: output, shape index: {0}]
  %s13 = inlined_call_operand.hbm [shape: bf16[4,2,8,8], index: 13, kind: output, shape index: {1}]
  %14 = xla_tuple %s12, %s13
  %s15 = sld [smem:[#allocation0]]
  $region137: #{tpu_custom_call.1} parent=0
    _
  %s17 = ssub.s32 1, %s15
  %s18 = scalar_select 0, %s17, %s15
  $region1: #{tpu_custom_call.1} parent=0
    #allocation2 [shape = 'u8[8192]{0}', space=vmem, size = 0x2000, scoped, tag = 'input window, operand 0']
    #allocation3 [shape = 's32[2]{0}', space=sflag, size = 0x8, scoped, tag = 'scoped memory for tpu_custom_call.1']
    #allocation4 [shape = 's32[2]{0}', space=sflag, size = 0x8, scoped, tag = 'scoped memory for tpu_custom_call.1']
    #allocation5 [shape = 'u8[8192]{0}', space=vmem, size = 0x2000, scoped, tag = 'input window, operand 1, single buffered']
    #allocation6 [shape = 's32[1]{0}', space=sflag, size = 0x4, scoped, tag = 'scoped memory for tpu_custom_call.1']
    #allocation7 [shape = 'u8[8192]{0}', space=vmem, size = 0x2000, scoped, tag = 'input window, operand 2, single buffered']
    #allocation8 [shape = 'u8[512]{0}', space=vmem, size = 0x400, scoped, tag = 'input window, operand 3, single buffered']
    #allocation9 [shape = 's32[1]{0}', space=sflag, size = 0x4, scoped, tag = 'scoped memory for tpu_custom_call.1']
    #allocation10 [shape = 'u8[512]{0}', space=vmem, size = 0x400, scoped, tag = 'input window, operand 4, single buffered']
    #allocation11 [shape = 'u8[512]{0}', space=vmem, size = 0x400, scoped, tag = 'input window, operand 5, single buffered']
    #allocation12 [shape = 's32[1]{0}', space=sflag, size = 0x4, scoped, tag = 'scoped memory for tpu_custom_call.1']
    #allocation13 [shape = 'u8[8192]{0}', space=vmem, size = 0x2000, scoped, tag = 'input window, operand 6, single buffered']
    #allocation14 [shape = 'u8[512]{0}', space=vmem, size = 0x400, scoped, tag = 'input window, operand 7, single buffered']
    #allocation15 [shape = 's32[1]{0}', space=sflag, size = 0x4, scoped, tag = 'scoped memory for tpu_custom_call.1']
    #allocation16 [shape = 'u8[32768]{0}', space=vmem, size = 0x8000, scoped, tag = 'input window, operand 8, single buffered']
    #allocation17 [shape = 'u8[512]{0}', space=vmem, size = 0x400, scoped, tag = 'input window, operand 9, single buffered']
    #allocation18 [shape = 's32[1]{0}', space=sflag, size = 0x4, scoped, tag = 'scoped memory for tpu_custom_call.1']
    #allocation19 [shape = 'u8[512]{0}', space=vmem, size = 0x400, scoped, tag = 'input window, operand 10, single buffered']
    #allocation20 [shape = 'u8[512]{0}', space=vmem, size = 0x400, scoped, tag = 'input window, operand 11, single buffered']
    #allocation21 [shape = 's32[1]{0}', space=sflag, size = 0x4, scoped, tag = 'scoped memory for tpu_custom_call.1']
    #allocation22 [shape = 'u8[8192]{0}', space=vmem, size = 0x2000, scoped, tag = 'output window, operand 0']
    #allocation23 [shape = 'u8[16384]{0}', space=vmem, size = 0x4000, scoped, tag = 'output window, operand 1']
    #allocation24 [shape = 's32[2]{0}', space=sflag, size = 0x8, scoped, tag = 'scoped memory for tpu_custom_call.1']
    %19 = vsyncpa [#allocation3], 0
    %s20 = scalar_lea.sflag [#allocation3], 1
    %21 = vsyncpa %s20, 0
    %22 = vsyncpa [#allocation6], 0
    %23 = vsyncpa [#allocation9], 0
    %24 = vsyncpa [#allocation12], 0
    %25 = vsyncpa [#allocation15], 0
    %26 = vsyncpa [#allocation18], 0
    %27 = vsyncpa [#allocation21], 0
    %28 = vsyncpa [#allocation4], 0
    %s29 = scalar_lea.sflag [#allocation4], 1
    %30 = vsyncpa %s29, 0
    %31 = vsyncpa [#allocation24], 0
    %s32 = scalar_lea.sflag [#allocation24], 1
    %33 = vsyncpa %s32, 0
    loop: start=0, step=1, limit=4
    $region2: #{tpu_custom_call.1} parent=1 // loop_pre_header
      _
    $region3: #{tpu_custom_call.1} parent=1 // loop_header
      %s35 = sphi 0, %s39
      %p36 = scmp.ge.s32.totalorder %s35, 4
      %s45 = sphi 0, %s47
      %s48 = sphi 0, %s45
      %s49 = sphi 0, %s48
      %s65 = sphi 0, %s49
      %s69 = sphi 0, %s69
      %s71 = sphi 0, %s69
      %s72 = sphi 0, %s71
      %s86 = sphi 0, %s72
      %s90 = sphi 0, %s90
      %s92 = sphi 0, %s90
      %s93 = sphi 0, %s92
      %s107 = sphi 0, %s93
      %s111 = sphi 0, %s111
      %s113 = sphi 0, %s111
      %s114 = sphi 0, %s113
      %s128 = sphi 0, %s114
      %s132 = sphi 0, %s132
      %s134 = sphi 0, %s132
      %s135 = sphi 0, %s134
      %s149 = sphi 0, %s135
      %s153 = sphi 0, %s153
      %s155 = sphi 0, %s153
      %s156 = sphi 0, %s155
      %s170 = sphi 0, %s156
      %s174 = sphi 0, %s174
      %s176 = sphi 0, %s174
      %s177 = sphi 0, %s176
      %s191 = sphi 0, %s177
      %s195 = sphi 0, %s195
      %s197 = sphi 0, %s195
      %s198 = sphi 0, %s197
      %s212 = sphi 0, %s198
      %s216 = sphi 0, %s216
      %s218 = sphi 0, %s216
      %s219 = sphi 0, %s218
      %s233 = sphi 0, %s219
      %s237 = sphi 0, %s237
      %s239 = sphi 0, %s237
      %s240 = sphi 0, %s239
      %s254 = sphi 0, %s240
      %s258 = sphi 0, %s258
      %s260 = sphi 0, %s258
      %s261 = sphi 0, %s260
      %s275 = sphi 0, %s261
      %s279 = sphi 0, %s279
      %s281 = sphi 0, %s279
      %s282 = sphi 0, %s281
      %s296 = sphi 0, %s282
      %s302 = sphi 0, %s304
      %s305 = sphi 0, %s302
      %s306 = sphi 0, %s305
      %s322 = sphi 0, %s306
      %s328 = sphi 0, %s330
      %s331 = sphi 0, %s328
      %s332 = sphi 0, %s331
      %s348 = sphi 0, %s332
    $region4: #{tpu_custom_call.1} parent=1 // loop_header_branch
      %38 = sbr.rel (%p36) target = $region8
    $region5: #{tpu_custom_call.1} parent=1 // loop_body
      %s40 = ssub.s32 %s35, 1
      %s41 = ssub.s32 %s35, 2
      %s42 = sadd.s32 %s35, 1
      %s43 = ssub.s32 %s35, %s42
      %p44 = scmp.eq.s32.totalorder %s43, 0
      %s46 = sadd.s32 %s45, 1
      %s47 = scalar_select %p44, %s45, %s46
      %p50 = pneg %p44
      %p51 = scmp.eq.s32.totalorder %s35, 1
      %p52 = por %p50, %p51
      %p53 = scmp.ne.s32.totalorder %s45, %s48
      %p54 = scmp.eq.s32.totalorder %s35, 0
      %p55 = por %p53, %p54
      %p56 = scmp.ne.s32.totalorder %s45, %s48
      %p57 = scmp.eq.s32.totalorder %s40, 1
      %p58 = por %p56, %p57
      %p59 = scmp.ne.s32.totalorder %s48, %s49
      %p60 = scmp.eq.s32.totalorder %s40, 0
      %p61 = por %p59, %p60
      %p62 = scmp.ne.s32.totalorder %s48, %s49
      %p63 = scmp.eq.s32.totalorder %s41, 1
      %p64 = por %p62, %p63
      %p66 = scmp.ne.s32.totalorder %s49, %s65
      %p67 = scmp.eq.s32.totalorder %s41, 0
      %p68 = por %p66, %p67
      %s70 = sadd.s32 %s69, 1
      %p73 = scmp.eq.s32.totalorder %s35, 1
      %p74 = scmp.ne.s32.totalorder %s69, %s71
      %p75 = scmp.eq.s32.totalorder %s35, 0
      %p76 = por %p74, %p75
      %p77 = scmp.ne.s32.totalorder %s69, %s71
      %p78 = scmp.eq.s32.totalorder %s40, 1
      %p79 = por %p77, %p78
      %p80 = scmp.ne.s32.totalorder %s71, %s72
      %p81 = scmp.eq.s32.totalorder %s40, 0
      %p82 = por %p80, %p81
      %p83 = scmp.ne.s32.totalorder %s71, %s72
      %p84 = scmp.eq.s32.totalorder %s41, 1
      %p85 = por %p83, %p84
      %p87 = scmp.ne.s32.totalorder %s72, %s86
      %p88 = scmp.eq.s32.totalorder %s41, 0
      %p89 = por %p87, %p88
      %s91 = sadd.s32 %s90, 1
      %p94 = scmp.eq.s32.totalorder %s35, 1
      %p95 = scmp.ne.s32.totalorder %s90, %s92
      %p96 = scmp.eq.s32.totalorder %s35, 0
      %p97 = por %p95, %p96
      %p98 = scmp.ne.s32.totalorder %s90, %s92
      %p99 = scmp.eq.s32.totalorder %s40, 1
      %p100 = por %p98, %p99
      %p101 = scmp.ne.s32.totalorder %s92, %s93
      %p102 = scmp.eq.s32.totalorder %s40, 0
      %p103 = por %p101, %p102
      %p104 = scmp.ne.s32.totalorder %s92, %s93
      %p105 = scmp.eq.s32.totalorder %s41, 1
      %p106 = por %p104, %p105
      %p108 = scmp.ne.s32.totalorder %s93, %s107
      %p109 = scmp.eq.s32.totalorder %s41, 0
      %p110 = por %p108, %p109
      %s112 = sadd.s32 %s111, 1
      %p115 = scmp.eq.s32.totalorder %s35, 1
      %p116 = scmp.ne.s32.totalorder %s111, %s113
      %p117 = scmp.eq.s32.totalorder %s35, 0
      %p118 = por %p116, %p117
      %p119 = scmp.ne.s32.totalorder %s111, %s113
      %p120 = scmp.eq.s32.totalorder %s40, 1
      %p121 = por %p119, %p120
      %p122 = scmp.ne.s32.totalorder %s113, %s114
      %p123 = scmp.eq.s32.totalorder %s40, 0
      %p124 = por %p122, %p123
      %p125 = scmp.ne.s32.totalorder %s113, %s114
      %p126 = scmp.eq.s32.totalorder %s41, 1
      %p127 = por %p125, %p126
      %p129 = scmp.ne.s32.totalorder %s114, %s128
      %p130 = scmp.eq.s32.totalorder %s41, 0
      %p131 = por %p129, %p130
      %s133 = sadd.s32 %s132, 1
      %p136 = scmp.eq.s32.totalorder %s35, 1
      %p137 = scmp.ne.s32.totalorder %s132, %s134
      %p138 = scmp.eq.s32.totalorder %s35, 0
      %p139 = por %p137, %p138
      %p140 = scmp.ne.s32.totalorder %s132, %s134
      %p141 = scmp.eq.s32.totalorder %s40, 1
      %p142 = por %p140, %p141
      %p143 = scmp.ne.s32.totalorder %s134, %s135
      %p144 = scmp.eq.s32.totalorder %s40, 0
      %p145 = por %p143, %p144
      %p146 = scmp.ne.s32.totalorder %s134, %s135
      %p147 = scmp.eq.s32.totalorder %s41, 1
      %p148 = por %p146, %p147
      %p150 = scmp.ne.s32.totalorder %s135, %s149
      %p151 = scmp.eq.s32.totalorder %s41, 0
      %p152 = por %p150, %p151
      %s154 = sadd.s32 %s153, 1
      %p157 = scmp.eq.s32.totalorder %s35, 1
      %p158 = scmp.ne.s32.totalorder %s153, %s155
      %p159 = scmp.eq.s32.totalorder %s35, 0
      %p160 = por %p158, %p159
      %p161 = scmp.ne.s32.totalorder %s153, %s155
      %p162 = scmp.eq.s32.totalorder %s40, 1
      %p163 = por %p161, %p162
      %p164 = scmp.ne.s32.totalorder %s155, %s156
      %p165 = scmp.eq.s32.totalorder %s40, 0
      %p166 = por %p164, %p165
      %p167 = scmp.ne.s32.totalorder %s155, %s156
      %p168 = scmp.eq.s32.totalorder %s41, 1
      %p169 = por %p167, %p168
      %p171 = scmp.ne.s32.totalorder %s156, %s170
      %p172 = scmp.eq.s32.totalorder %s41, 0
      %p173 = por %p171, %p172
      %s175 = sadd.s32 %s174, 1
      %p178 = scmp.eq.s32.totalorder %s35, 1
      %p179 = scmp.ne.s32.totalorder %s174, %s176
      %p180 = scmp.eq.s32.totalorder %s35, 0
      %p181 = por %p179, %p180
      %p182 = scmp.ne.s32.totalorder %s174, %s176
      %p183 = scmp.eq.s32.totalorder %s40, 1
      %p184 = por %p182, %p183
      %p185 = scmp.ne.s32.totalorder %s176, %s177
      %p186 = scmp.eq.s32.totalorder %s40, 0
      %p187 = por %p185, %p186
      %p188 = scmp.ne.s32.totalorder %s176, %s177
      %p189 = scmp.eq.s32.totalorder %s41, 1
      %p190 = por %p188, %p189
      %p192 = scmp.ne.s32.totalorder %s177, %s191
      %p193 = scmp.eq.s32.totalorder %s41, 0
      %p194 = por %p192, %p193
      %s196 = sadd.s32 %s195, 1
      %p199 = scmp.eq.s32.totalorder %s35, 1
      %p200 = scmp.ne.s32.totalorder %s195, %s197
      %p201 = scmp.eq.s32.totalorder %s35, 0
      %p202 = por %p200, %p201
      %p203 = scmp.ne.s32.totalorder %s195, %s197
      %p204 = scmp.eq.s32.totalorder %s40, 1
      %p205 = por %p203, %p204
      %p206 = scmp.ne.s32.totalorder %s197, %s198
      %p207 = scmp.eq.s32.totalorder %s40, 0
      %p208 = por %p206, %p207
      %p209 = scmp.ne.s32.totalorder %s197, %s198
      %p210 = scmp.eq.s32.totalorder %s41, 1
      %p211 = por %p209, %p210
      %p213 = scmp.ne.s32.totalorder %s198, %s212
      %p214 = scmp.eq.s32.totalorder %s41, 0
      %p215 = por %p213, %p214
      %s217 = sadd.s32 %s216, 1
      %p220 = scmp.eq.s32.totalorder %s35, 1
      %p221 = scmp.ne.s32.totalorder %s216, %s218
      %p222 = scmp.eq.s32.totalorder %s35, 0
      %p223 = por %p221, %p222
      %p224 = scmp.ne.s32.totalorder %s216, %s218
      %p225 = scmp.eq.s32.totalorder %s40, 1
      %p226 = por %p224, %p225
      %p227 = scmp.ne.s32.totalorder %s218, %s219
      %p228 = scmp.eq.s32.totalorder %s40, 0
      %p229 = por %p227, %p228
      %p230 = scmp.ne.s32.totalorder %s218, %s219
      %p231 = scmp.eq.s32.totalorder %s41, 1
      %p232 = por %p230, %p231
      %p234 = scmp.ne.s32.totalorder %s219, %s233
      %p235 = scmp.eq.s32.totalorder %s41, 0
      %p236 = por %p234, %p235
      %s238 = sadd.s32 %s237, 1
      %p241 = scmp.eq.s32.totalorder %s35, 1
      %p242 = scmp.ne.s32.totalorder %s237, %s239
      %p243 = scmp.eq.s32.totalorder %s35, 0
      %p244 = por %p242, %p243
      %p245 = scmp.ne.s32.totalorder %s237, %s239
      %p246 = scmp.eq.s32.totalorder %s40, 1
      %p247 = por %p245, %p246
      %p248 = scmp.ne.s32.totalorder %s239, %s240
      %p249 = scmp.eq.s32.totalorder %s40, 0
      %p250 = por %p248, %p249
      %p251 = scmp.ne.s32.totalorder %s239, %s240
      %p252 = scmp.eq.s32.totalorder %s41, 1
      %p253 = por %p251, %p252
      %p255 = scmp.ne.s32.totalorder %s240, %s254
      %p256 = scmp.eq.s32.totalorder %s41, 0
      %p257 = por %p255, %p256
      %s259 = sadd.s32 %s258, 1
      %p262 = scmp.eq.s32.totalorder %s35, 1
      %p263 = scmp.ne.s32.totalorder %s258, %s260
      %p264 = scmp.eq.s32.totalorder %s35, 0
      %p265 = por %p263, %p264
      %p266 = scmp.ne.s32.totalorder %s258, %s260
      %p267 = scmp.eq.s32.totalorder %s40, 1
      %p268 = por %p266, %p267
      %p269 = scmp.ne.s32.totalorder %s260, %s261
      %p270 = scmp.eq.s32.totalorder %s40, 0
      %p271 = por %p269, %p270
      %p272 = scmp.ne.s32.totalorder %s260, %s261
      %p273 = scmp.eq.s32.totalorder %s41, 1
      %p274 = por %p272, %p273
      %p276 = scmp.ne.s32.totalorder %s261, %s275
      %p277 = scmp.eq.s32.totalorder %s41, 0
      %p278 = por %p276, %p277
      %s280 = sadd.s32 %s279, 1
      %p283 = scmp.eq.s32.totalorder %s35, 1
      %p284 = scmp.ne.s32.totalorder %s279, %s281
      %p285 = scmp.eq.s32.totalorder %s35, 0
      %p286 = por %p284, %p285
      %p287 = scmp.ne.s32.totalorder %s279, %s281
      %p288 = scmp.eq.s32.totalorder %s40, 1
      %p289 = por %p287, %p288
      %p290 = scmp.ne.s32.totalorder %s281, %s282
      %p291 = scmp.eq.s32.totalorder %s40, 0
      %p292 = por %p290, %p291
      %p293 = scmp.ne.s32.totalorder %s281, %s282
      %p294 = scmp.eq.s32.totalorder %s41, 1
      %p295 = por %p293, %p294
      %p297 = scmp.ne.s32.totalorder %s282, %s296
      %p298 = scmp.eq.s32.totalorder %s41, 0
      %p299 = por %p297, %p298
      %s300 = ssub.s32 %s35, %s42
      %p301 = scmp.eq.s32.totalorder %s300, 0
      %s303 = sadd.s32 %s302, 1
      %s304 = scalar_select %p301, %s302, %s303
      %p307 = pneg %p301
      %p308 = scmp.eq.s32.totalorder %s35, 1
      %p309 = por %p307, %p308
      %p310 = scmp.ne.s32.totalorder %s302, %s305
      %p311 = scmp.eq.s32.totalorder %s35, 0
      %p312 = por %p310, %p311
      %p313 = scmp.ne.s32.totalorder %s302, %s305
      %p314 = scmp.eq.s32.totalorder %s40, 1
      %p315 = por %p313, %p314
      %p316 = scmp.ne.s32.totalorder %s305, %s306
      %p317 = scmp.eq.s32.totalorder %s40, 0
      %p318 = por %p316, %p317
      %p319 = scmp.ne.s32.totalorder %s305, %s306
      %p320 = scmp.eq.s32.totalorder %s41, 1
      %p321 = por %p319, %p320
      %p323 = scmp.ne.s32.totalorder %s306, %s322
      %p324 = scmp.eq.s32.totalorder %s41, 0
      %p325 = por %p323, %p324
      %s326 = ssub.s32 %s35, %s42
      %p327 = scmp.eq.s32.totalorder %s326, 0
      %s329 = sadd.s32 %s328, 1
      %s330 = scalar_select %p327, %s328, %s329
      %p333 = pneg %p327
      %p334 = scmp.eq.s32.totalorder %s35, 1
      %p335 = por %p333, %p334
      %p336 = scmp.ne.s32.totalorder %s328, %s331
      %p337 = scmp.eq.s32.totalorder %s35, 0
      %p338 = por %p336, %p337
      %p339 = scmp.ne.s32.totalorder %s328, %s331
      %p340 = scmp.eq.s32.totalorder %s40, 1
      %p341 = por %p339, %p340
      %p342 = scmp.ne.s32.totalorder %s331, %s332
      %p343 = scmp.eq.s32.totalorder %s40, 0
      %p344 = por %p342, %p343
      %p345 = scmp.ne.s32.totalorder %s331, %s332
      %p346 = scmp.eq.s32.totalorder %s41, 1
      %p347 = por %p345, %p346
      %p349 = scmp.ne.s32.totalorder %s332, %s348
      %p350 = scmp.eq.s32.totalorder %s41, 0
      %p351 = por %p349, %p350
      %p352 = scmp.le.s32.totalorder 1, %s35
      %p353 = scmp.lt.s32.totalorder %s35, 3
      %p354 = pnand %p352, %p353
      %p355 = pneg %p354
      // Predicated region
      $region9: #{tpu_custom_call.1} parent=5 // pred_check
        _
      $region10: #{tpu_custom_call.1} parent=5 // pred_check_branch
        %357 = sbr.rel (%p354) target = $region12
      $region11: #{tpu_custom_call.1} parent=5 // pred_region
        %s358 = ssub.s32 %s35, 1
        // Predicated region
        $region13: #{tpu_custom_call.1} parent=11 // pred_check
          %p359 = pneg %p82
        $region14: #{tpu_custom_call.1} parent=11 // pred_check_branch
          %361 = sbr.rel (%p359) target = $region16
        $region15: #{tpu_custom_call.1} parent=11 // pred_region
          %s363 = ssub.s32 256, 256
          %364 = vsyncadd [#allocation6], %s363
          %s365 = sshll.u32 [#allocation5], 4
          %s366 = int_to_ptr.vmem [resolvable:$true] %s365
          %371 = dma.hbm_to_vmem [thread:$0]  %s1, 256, %s366, [#allocation6], 64, 64, 4
        $region16: #{tpu_custom_call.1} parent=11 // pred_fallthru
          _
        // Predicated region
        $region17: #{tpu_custom_call.1} parent=11 // pred_check
          %p372 = pneg %p103
        $region18: #{tpu_custom_call.1} parent=11 // pred_check_branch
          %374 = sbr.rel (%p372) target = $region20
        $region19: #{tpu_custom_call.1} parent=11 // pred_region
          %s376 = ssub.s32 256, 256
          %377 = vsyncadd [#allocation6], %s376
          %s378 = sshll.u32 [#allocation7], 4
          %s379 = int_to_ptr.vmem [resolvable:$true] %s378
          %384 = dma.hbm_to_vmem [thread:$0]  %s2, 256, %s379, [#allocation6], 64, 64, 4
        $region20: #{tpu_custom_call.1} parent=11 // pred_fallthru
          _
        // Predicated region
        $region21: #{tpu_custom_call.1} parent=11 // pred_check
          %p385 = pneg %p124
        $region22: #{tpu_custom_call.1} parent=11 // pred_check_branch
          %387 = sbr.rel (%p385) target = $region24
        $region23: #{tpu_custom_call.1} parent=11 // pred_region
          %s389 = ssub.s32 16, 16
          %390 = vsyncadd [#allocation9], %s389
          %s392 = sshll.u32 [#allocation8], 4
          %s393 = int_to_ptr.vmem [resolvable:$true] %s392
          %395 = dma.hbm_to_vmem [thread:$0]  %s3, 16, %s393, [#allocation9]
        $region24: #{tpu_custom_call.1} parent=11 // pred_fallthru
          _
        // Predicated region
        $region25: #{tpu_custom_call.1} parent=11 // pred_check
          %p396 = pneg %p145
        $region26: #{tpu_custom_call.1} parent=11 // pred_check_branch
          %398 = sbr.rel (%p396) target = $region28
        $region27: #{tpu_custom_call.1} parent=11 // pred_region
          %s400 = ssub.s32 16, 16
          %401 = vsyncadd [#allocation9], %s400
          %s403 = sshll.u32 [#allocation10], 4
          %s404 = int_to_ptr.vmem [resolvable:$true] %s403
          %406 = dma.hbm_to_vmem [thread:$0]  %s4, 16, %s404, [#allocation9]
        $region28: #{tpu_custom_call.1} parent=11 // pred_fallthru
          _
        // Predicated region
        $region29: #{tpu_custom_call.1} parent=11 // pred_check
          %p407 = pneg %p166
        $region30: #{tpu_custom_call.1} parent=11 // pred_check_branch
          %409 = sbr.rel (%p407) target = $region32
        $region31: #{tpu_custom_call.1} parent=11 // pred_region
          %s411 = ssub.s32 16, 16
          %412 = vsyncadd [#allocation12], %s411
          %s414 = sshll.u32 [#allocation11], 4
          %s415 = int_to_ptr.vmem [resolvable:$true] %s414
          %417 = dma.hbm_to_vmem [thread:$0]  %s5, 16, %s415, [#allocation12]
        $region32: #{tpu_custom_call.1} parent=11 // pred_fallthru
          _
        // Predicated region
        $region33: #{tpu_custom_call.1} parent=11 // pred_check
          %p418 = pneg %p187
        $region34: #{tpu_custom_call.1} parent=11 // pred_check_branch
          %420 = sbr.rel (%p418) target = $region36
        $region35: #{tpu_custom_call.1} parent=11 // pred_region
          %s422 = ssub.s32 256, 256
          %423 = vsyncadd [#allocation12], %s422
          %s424 = sshll.u32 [#allocation13], 4
          %s425 = int_to_ptr.vmem [resolvable:$true] %s424
          %430 = dma.hbm_to_vmem [thread:$0]  %s6, 256, %s425, [#allocation12], 64, 64, 4
        $region36: #{tpu_custom_call.1} parent=11 // pred_fallthru
          _
        // Predicated region
        $region37: #{tpu_custom_call.1} parent=11 // pred_check
          %p431 = pneg %p208
        $region38: #{tpu_custom_call.1} parent=11 // pred_check_branch
          %433 = sbr.rel (%p431) target = $region40
        $region39: #{tpu_custom_call.1} parent=11 // pred_region
          %s435 = ssub.s32 16, 16
          %436 = vsyncadd [#allocation15], %s435
          %s438 = sshll.u32 [#allocation14], 4
          %s439 = int_to_ptr.vmem [resolvable:$true] %s438
          %441 = dma.hbm_to_vmem [thread:$0]  %s7, 16, %s439, [#allocation15]
        $region40: #{tpu_custom_call.1} parent=11 // pred_fallthru
          _
        // Predicated region
        $region41: #{tpu_custom_call.1} parent=11 // pred_check
          %p442 = pneg %p229
        $region42: #{tpu_custom_call.1} parent=11 // pred_check_branch
          %444 = sbr.rel (%p442) target = $region44
        $region43: #{tpu_custom_call.1} parent=11 // pred_region
          %s446 = ssub.s32 1024, 1024
          %447 = vsyncadd [#allocation15], %s446
          %s448 = sshll.u32 [#allocation16], 4
          %s449 = int_to_ptr.vmem [resolvable:$true] %s448
          %454 = dma.hbm_to_vmem [thread:$0]  %s8, 1024, %s449, [#allocation15], 64, 64, 4
        $region44: #{tpu_custom_call.1} parent=11 // pred_fallthru
          _
        // Predicated region
        $region45: #{tpu_custom_call.1} parent=11 // pred_check
          %p455 = pneg %p250
        $region46: #{tpu_custom_call.1} parent=11 // pred_check_branch
          %457 = sbr.rel (%p455) target = $region48
        $region47: #{tpu_custom_call.1} parent=11 // pred_region
          %s459 = ssub.s32 16, 16
          %460 = vsyncadd [#allocation18], %s459
          %s462 = sshll.u32 [#allocation17], 4
          %s463 = int_to_ptr.vmem [resolvable:$true] %s462
          %465 = dma.hbm_to_vmem [thread:$0]  %s9, 16, %s463, [#allocation18]
        $region48: #{tpu_custom_call.1} parent=11 // pred_fallthru
          _
        // Predicated region
        $region49: #{tpu_custom_call.1} parent=11 // pred_check
          %p466 = pneg %p271
        $region50: #{tpu_custom_call.1} parent=11 // pred_check_branch
          %468 = sbr.rel (%p466) target = $region52
        $region51: #{tpu_custom_call.1} parent=11 // pred_region
          %s470 = ssub.s32 16, 16
          %471 = vsyncadd [#allocation18], %s470
          %s473 = sshll.u32 [#allocation19], 4
          %s474 = int_to_ptr.vmem [resolvable:$true] %s473
          %476 = dma.hbm_to_vmem [thread:$0]  %s10, 16, %s474, [#allocation18]
        $region52: #{tpu_custom_call.1} parent=11 // pred_fallthru
          _
        // Predicated region
        $region53: #{tpu_custom_call.1} parent=11 // pred_check
          %p477 = pneg %p292
        $region54: #{tpu_custom_call.1} parent=11 // pred_check_branch
          %479 = sbr.rel (%p477) target = $region56
        $region55: #{tpu_custom_call.1} parent=11 // pred_region
          %s481 = ssub.s32 16, 16
          %482 = vsyncadd [#allocation21], %s481
          %s484 = sshll.u32 [#allocation20], 4
          %s485 = int_to_ptr.vmem [resolvable:$true] %s484
          %487 = dma.hbm_to_vmem [thread:$0]  %s11, 16, %s485, [#allocation21]
        $region56: #{tpu_custom_call.1} parent=11 // pred_fallthru
          _
      $region12: #{tpu_custom_call.1} parent=5 // pred_fallthru
        _
      %p488 = scmp.lt.s32.totalorder %s35, 2
      // Predicated region
      $region57: #{tpu_custom_call.1} parent=5 // pred_check
        %p489 = pneg %p488
      $region58: #{tpu_custom_call.1} parent=5 // pred_check_branch
        %491 = sbr.rel (%p489) target = $region60
      $region59: #{tpu_custom_call.1} parent=5 // pred_region
        // Predicated region
        $region61: #{tpu_custom_call.1} parent=59 // pred_check
          %p492 = pneg %p55
        $region62: #{tpu_custom_call.1} parent=59 // pred_check_branch
          %494 = sbr.rel (%p492) target = $region64
        $region63: #{tpu_custom_call.1} parent=59 // pred_region
          %s495 = sand.u32 %s45, 1
          %s496 = scalar_lea.sflag [#allocation3], %s495
          %s497 = sand.u32 %s45, 1
          %s498 = smul.addr %s497, 8
          %s499 = scalar_lea.vmem [#allocation2], %s498
          %s501 = ssub.s32 128, 128
          %502 = vsyncadd %s496, %s501
          %s503 = smul.addr %s35, 128
          %s504 = scalar_lea.hbm %s0, %s503
          %s506 = sshll.u32 %s499, 4
          %s507 = int_to_ptr.vmem [resolvable:$true] %s506
          %509 = dma.hbm_to_vmem [thread:$0]  %s504, 128, %s507, %s496
        $region64: #{tpu_custom_call.1} parent=59 // pred_fallthru
          _
      $region60: #{tpu_custom_call.1} parent=5 // pred_fallthru
        _
      %p510 = scmp.le.s32.totalorder 1, %s35
      %p511 = scmp.lt.s32.totalorder %s35, 3
      %p512 = pnand %p510, %p511
      %p513 = pneg %p512
      // Predicated region
      $region65: #{tpu_custom_call.1} parent=5 // pred_check
        _
      $region66: #{tpu_custom_call.1} parent=5 // pred_check_branch
        %515 = sbr.rel (%p512) target = $region68
      $region67: #{tpu_custom_call.1} parent=5 // pred_region
        %s516 = ssub.s32 %s35, 1
        %s517 = sand.u32 %s48, 1
        %s518 = scalar_lea.sflag [#allocation3], %s517
        %s519 = sand.u32 %s48, 1
        %s520 = smul.addr %s519, 8
        %s521 = scalar_lea.vmem [#allocation2], %s520
        // Predicated region
        $region69: #{tpu_custom_call.1} parent=67 // pred_check
          %p522 = pneg %p61
        $region70: #{tpu_custom_call.1} parent=67 // pred_check_branch
          %524 = sbr.rel (%p522) target = $region72
        $region71: #{tpu_custom_call.1} parent=67 // pred_region
          %525 = dma.done %s518, 128
        $region72: #{tpu_custom_call.1} parent=67 // pred_fallthru
          _
        // Predicated region
        $region73: #{tpu_custom_call.1} parent=67 // pred_check
          %p526 = pneg %p82
        $region74: #{tpu_custom_call.1} parent=67 // pred_check_branch
          %528 = sbr.rel (%p526) target = $region76
        $region75: #{tpu_custom_call.1} parent=67 // pred_region
          %529 = dma.done [#allocation6], 256
        $region76: #{tpu_custom_call.1} parent=67 // pred_fallthru
          _
        // Predicated region
        $region77: #{tpu_custom_call.1} parent=67 // pred_check
          %p530 = pneg %p103
        $region78: #{tpu_custom_call.1} parent=67 // pred_check_branch
          %532 = sbr.rel (%p530) target = $region80
        $region79: #{tpu_custom_call.1} parent=67 // pred_region
          %533 = dma.done [#allocation6], 256
        $region80: #{tpu_custom_call.1} parent=67 // pred_fallthru
          _
        // Predicated region
        $region81: #{tpu_custom_call.1} parent=67 // pred_check
          %p534 = pneg %p124
        $region82: #{tpu_custom_call.1} parent=67 // pred_check_branch
          %536 = sbr.rel (%p534) target = $region84
        $region83: #{tpu_custom_call.1} parent=67 // pred_region
          %537 = dma.done [#allocation9], 16
        $region84: #{tpu_custom_call.1} parent=67 // pred_fallthru
          _
        // Predicated region
        $region85: #{tpu_custom_call.1} parent=67 // pred_check
          %p538 = pneg %p145
        $region86: #{tpu_custom_call.1} parent=67 // pred_check_branch
          %540 = sbr.rel (%p538) target = $region88
        $region87: #{tpu_custom_call.1} parent=67 // pred_region
          %541 = dma.done [#allocation9], 16
        $region88: #{tpu_custom_call.1} parent=67 // pred_fallthru
          _
        // Predicated region
        $region89: #{tpu_custom_call.1} parent=67 // pred_check
          %p542 = pneg %p166
        $region90: #{tpu_custom_call.1} parent=67 // pred_check_branch
          %544 = sbr.rel (%p542) target = $region92
        $region91: #{tpu_custom_call.1} parent=67 // pred_region
          %545 = dma.done [#allocation12], 16
        $region92: #{tpu_custom_call.1} parent=67 // pred_fallthru
          _
        // Predicated region
        $region93: #{tpu_custom_call.1} parent=67 // pred_check
          %p546 = pneg %p187
        $region94: #{tpu_custom_call.1} parent=67 // pred_check_branch
          %548 = sbr.rel (%p546) target = $region96
        $region95: #{tpu_custom_call.1} parent=67 // pred_region
          %549 = dma.done [#allocation12], 256
        $region96: #{tpu_custom_call.1} parent=67 // pred_fallthru
          _
        // Predicated region
        $region97: #{tpu_custom_call.1} parent=67 // pred_check
          %p550 = pneg %p208
        $region98: #{tpu_custom_call.1} parent=67 // pred_check_branch
          %552 = sbr.rel (%p550) target = $region100
        $region99: #{tpu_custom_call.1} parent=67 // pred_region
          %553 = dma.done [#allocation15], 16
        $region100: #{tpu_custom_call.1} parent=67 // pred_fallthru
          _
        // Predicated region
        $region101: #{tpu_custom_call.1} parent=67 // pred_check
          %p554 = pneg %p229
        $region102: #{tpu_custom_call.1} parent=67 // pred_check_branch
          %556 = sbr.rel (%p554) target = $region104
        $region103: #{tpu_custom_call.1} parent=67 // pred_region
          %557 = dma.done [#allocation15], 1024
        $region104: #{tpu_custom_call.1} parent=67 // pred_fallthru
          _
        // Predicated region
        $region105: #{tpu_custom_call.1} parent=67 // pred_check
          %p558 = pneg %p250
        $region106: #{tpu_custom_call.1} parent=67 // pred_check_branch
          %560 = sbr.rel (%p558) target = $region108
        $region107: #{tpu_custom_call.1} parent=67 // pred_region
          %561 = dma.done [#allocation18], 16
        $region108: #{tpu_custom_call.1} parent=67 // pred_fallthru
          _
        // Predicated region
        $region109: #{tpu_custom_call.1} parent=67 // pred_check
          %p562 = pneg %p271
        $region110: #{tpu_custom_call.1} parent=67 // pred_check_branch
          %564 = sbr.rel (%p562) target = $region112
        $region111: #{tpu_custom_call.1} parent=67 // pred_region
          %565 = dma.done [#allocation18], 16
        $region112: #{tpu_custom_call.1} parent=67 // pred_fallthru
          _
        // Predicated region
        $region113: #{tpu_custom_call.1} parent=67 // pred_check
          %p566 = pneg %p292
        $region114: #{tpu_custom_call.1} parent=67 // pred_check_branch
          %568 = sbr.rel (%p566) target = $region116
        $region115: #{tpu_custom_call.1} parent=67 // pred_region
          %569 = dma.done [#allocation21], 16
        $region116: #{tpu_custom_call.1} parent=67 // pred_fallthru
          _
        %s570 = sand.u32 %s48, 1
        %s571 = scalar_lea.sflag [#allocation3], %s570
        %s572 = sand.u32 %s48, 1
        %s573 = smul.addr %s572, 8
        %s574 = scalar_lea.vmem [#allocation2], %s573
        %p575 = pneg %p61
        %p576 = pneg %p58
        %p577 = pneg %p82
        %p578 = pneg %p79
        %p579 = pneg %p103
        %p580 = pneg %p100
        %p581 = pneg %p124
        %p582 = pneg %p121
        %p583 = pneg %p145
        %p584 = pneg %p142
        %p585 = pneg %p166
        %p586 = pneg %p163
        %p587 = pneg %p187
        %p588 = pneg %p184
        %p589 = pneg %p208
        %p590 = pneg %p205
        %p591 = pneg %p229
        %p592 = pneg %p226
        %p593 = pneg %p250
        %p594 = pneg %p247
        %p595 = pneg %p271
        %p596 = pneg %p268
        %p597 = pneg %p292
        %p598 = pneg %p289
        %p599 = pneg %p318
        %p600 = pneg %p315
        %s601 = sand.u32 %s305, 1
        %s602 = scalar_lea.sflag [#allocation4], %s601
        %s603 = sand.u32 %s305, 1
        %s604 = smul.addr %s603, 8
        %s605 = scalar_lea.vmem [#allocation22], %s604
        %p606 = pneg %p344
        %p607 = pneg %p341
        %s608 = sand.u32 %s331, 1
        %s609 = scalar_lea.sflag [#allocation24], %s608
        %s610 = sand.u32 %s331, 1
        %s611 = smul.addr %s610, 16
        %s612 = scalar_lea.vmem [#allocation23], %s611
        %v614 = vld [vmem:[%s521] sm:$0xff]
        %v615 = vpack.c.bf16 %v614, %v614
        %v616 = vld [vmem:[#allocation5] sm:$0xf]
        %v617 = vld [vmem:[#allocation5 + $0x4] sm:$0xf]
        %v618 = vld [vmem:[#allocation5 + $0x8] sm:$0xf]
        %v619 = vld [vmem:[#allocation5 + $0xc] sm:$0xf]
        %v624 = vunpack.c.l.b16 %v616
        %v625 = vunpack.c.l.b16 %v617
        %v626 = vunpack.c.l.b16 %v618
        %v627 = vunpack.c.l.b16 %v619
        %v628 = vpack.c.b16 %v625, %v624
        %v629 = vpack.c.b16 %v627, %v626
        %vm632 = vcmask 261120
        %v634 = vsel %vm632, %v615, 0
        %636 = vmatprep.subr.bf16.mxu0 0
        %637 = vmatpush1.bf16.msra.mxu0 %v628
        %638 = vmatprep.subr.bf16.mxu0 0
        %639 = vmatpush1.bf16.msra.mxu0 %v629
        %640 = vmatprep.subr.bf16.mxu0 0
        %641 = vmatpush1.bf16.msra.mxu0 0
        %642 = vmatprep.subr.bf16.mxu0 0
        %643 = vmatpush1.bf16.msra.mxu0 0
        %644 = vmatprep.subr.bf16.mxu0 0
        %645 = vmatpush1.bf16.msra.mxu0 0
        %646 = vmatprep.subr.bf16.mxu0 0
        %647 = vmatpush1.bf16.msra.mxu0 0
        %648 = vmatprep.subr.bf16.mxu0 0
        %649 = vmatpush1.bf16.msra.mxu0 0
        %650 = vmatprep.subr.bf16.mxu0 0
        %651 = vmatpush1.bf16.msra.mxu0 0
        %652 = vmatprep.subr.bf16.mxu0 0
        %653 = vmatpush1.bf16.msra.mxu0 0
        %654 = vmatprep.subr.bf16.mxu0 0
        %655 = vmatpush1.bf16.msra.mxu0 0
        %656 = vmatprep.subr.bf16.mxu0 0
        %657 = vmatpush1.bf16.msra.mxu0 0
        %658 = vmatprep.subr.bf16.mxu0 0
        %659 = vmatpush1.bf16.msra.mxu0 0
        %660 = vmatprep.subr.bf16.mxu0 0
        %661 = vmatpush1.bf16.msra.mxu0 0
        %662 = vmatprep.subr.bf16.mxu0 0
        %663 = vmatpush1.bf16.msra.mxu0 0
        %664 = vmatprep.subr.bf16.mxu0 0
        %665 = vmatpush1.bf16.msra.mxu0 0
        %666 = vmatprep.subr.bf16.mxu0 0
        %667 = vmatpush1.bf16.msra.mxu0 0
        %668 = vmatprep.mubr.bf16.mxu0 0
        %669 = vmatmul.mubr.bf16.gmra.mrb[0].mxu0 %v634
        %v670 = vpop.f32.mrb[0].mxu0
        %v671 = vadd.f32 0.0, %v670
        %v672 = vpop.f32.mrb[0].mxu0
        %v673 = vpop.f32.mrb[0].mxu0
        %v674 = vpop.f32.mrb[0].mxu0
        %675 = vdwg.mxu0
        %v676 = vpack.c.bf16 %v671, %v671
        %678 = vrot.lane.b32.xlu0 %v676, 120
        %v679 = vpop.permute.xlu0 %678
        %680 = vrot.lane.b32.xlu0 %v676, 112
        %v681 = vpop.permute.xlu0 %680
        %682 = vrot.lane.b32.xlu0 %v676, 104
        %v683 = vpop.permute.xlu0 %682
        %v685 = vunpack.c.l.s4 1983009808
        %v686 = vunpack.c.0.s8 %v685
        %v687 = vlaneseq
        %v688 = vshrl.u32 %v687, 7
        %v689 = vsub.s32 %v686, %v688
        %v690 = vrot.slane %v676, %v689
        %v693 = vunpack.c.l.s4 1983009808
        %v694 = vunpack.c.0.s8 %v693
        %v695 = vlaneseq
        %v696 = vshrl.u32 %v695, 7
        %v697 = vsub.s32 %v694, %v696
        %v698 = vrot.slane %v681, %v697
        %v699 = vcombine.low %v690, %v698
        %v700 = vcombine.high %v690, %v698
        %v702 = vunpack.c.l.s4 1934713408
        %v703 = vunpack.c.0.s8 %v702
        %v704 = vlaneseq
        %v705 = vshrl.u32 %v704, 7
        %v706 = vsub.s32 %v703, %v705
        %v707 = vrot.slane %v699, %v706
        %v709 = vunpack.c.l.s4 1934713408
        %v710 = vunpack.c.0.s8 %v709
        %v711 = vlaneseq
        %v712 = vshrl.u32 %v711, 7
        %v713 = vsub.s32 %v710, %v712
        %v714 = vrot.slane %v700, %v713
        %v715 = vcombine.high %v707, 0
        %v716 = vcombine.high %v714, 0
        %v719 = vunpack.c.l.s4 1983009808
        %v720 = vunpack.c.0.s8 %v719
        %v721 = vlaneseq
        %v722 = vshrl.u32 %v721, 7
        %v723 = vsub.s32 %v720, %v722
        %v724 = vrot.slane %v679, %v723
        %v727 = vunpack.c.l.s4 1983009808
        %v728 = vunpack.c.0.s8 %v727
        %v729 = vlaneseq
        %v730 = vshrl.u32 %v729, 7
        %v731 = vsub.s32 %v728, %v730
        %v732 = vrot.slane %v683, %v731
        %v733 = vcombine.low %v724, %v732
        %v734 = vcombine.high %v724, %v732
        %v736 = vunpack.c.l.s4 1934713408
        %v737 = vunpack.c.0.s8 %v736
        %v738 = vlaneseq
        %v739 = vshrl.u32 %v738, 7
        %v740 = vsub.s32 %v737, %v739
        %v741 = vrot.slane %v733, %v740
        %v743 = vunpack.c.l.s4 1934713408
        %v744 = vunpack.c.0.s8 %v743
        %v745 = vlaneseq
        %v746 = vshrl.u32 %v745, 7
        %v747 = vsub.s32 %v744, %v746
        %v748 = vrot.slane %v734, %v747
        %v749 = vcombine.high %v741, 0
        %v750 = vcombine.high %v748, 0
        %v753 = vpack.i.b16 %v741, %v707
        %v755 = vshrl.u32 %v707, 16
        %v756 = vshrl.u32 %v741, 16
        %v757 = vpack.i.b16 %v756, %v755
        %v761 = vpack.i.b16 %v749, %v715
        %v763 = vshrl.u32 %v715, 16
        %v764 = vshrl.u32 %v749, 16
        %v765 = vpack.i.b16 %v764, %v763
        %v769 = vpack.i.b16 %v748, %v714
        %v771 = vshrl.u32 %v714, 16
        %v772 = vshrl.u32 %v748, 16
        %v773 = vpack.i.b16 %v772, %v771
        %v777 = vpack.i.b16 %v750, %v716
        %v779 = vshrl.u32 %v716, 16
        %v780 = vshrl.u32 %v750, 16
        %v781 = vpack.i.b16 %v780, %v779
        %v783 = vcombine.low %v753, %v769
        %v785 = vunpack.c.l.s4 1983009808
        %v786 = vunpack.c.0.s8 %v785
        %v787 = vlaneseq
        %v788 = vshrl.u32 %v787, 7
        %v789 = vsub.s32 %v786, %v788
        %v790 = vrot.slane %v783, %v789
        %v791 = vcombine.low %v761, %v777
        %v793 = vunpack.c.l.s4 1983009808
        %v794 = vunpack.c.0.s8 %v793
        %v795 = vlaneseq
        %v796 = vshrl.u32 %v795, 7
        %v797 = vsub.s32 %v794, %v796
        %v798 = vrot.slane %v791, %v797
        %v799 = vcombine.low %v790, %v798
        %v801 = vunpack.c.l.s4 1934713408
        %v802 = vunpack.c.0.s8 %v801
        %v803 = vlaneseq
        %v804 = vshrl.u32 %v803, 7
        %v805 = vsub.s32 %v802, %v804
        %v806 = vrot.slane %v799, %v805
        %v807 = vcombine.high %v806, 0
        %v808 = vcombine.low %v757, %v773
        %v810 = vunpack.c.l.s4 1983009808
        %v811 = vunpack.c.0.s8 %v810
        %v812 = vlaneseq
        %v813 = vshrl.u32 %v812, 7
        %v814 = vsub.s32 %v811, %v813
        %v815 = vrot.slane %v808, %v814
        %v816 = vcombine.low %v765, %v781
        %v818 = vunpack.c.l.s4 1983009808
        %v819 = vunpack.c.0.s8 %v818
        %v820 = vlaneseq
        %v821 = vshrl.u32 %v820, 7
        %v822 = vsub.s32 %v819, %v821
        %v823 = vrot.slane %v816, %v822
        %v824 = vcombine.low %v815, %v823
        %v826 = vunpack.c.l.s4 1934713408
        %v827 = vunpack.c.0.s8 %v826
        %v828 = vlaneseq
        %v829 = vshrl.u32 %v828, 7
        %v830 = vsub.s32 %v827, %v829
        %v831 = vrot.slane %v824, %v830
        %v832 = vcombine.high %v831, 0
        %v835 = vpack.i.b16 %v831, %v806
        %v836 = vshrl.u32 %v806, 16
        %v837 = vshrl.u32 %v831, 16
        %v838 = vpack.i.b16 %v837, %v836
        %v841 = vpack.i.b16 %v832, %v807
        %v842 = vshrl.u32 %v807, 16
        %v843 = vshrl.u32 %v832, 16
        %v844 = vpack.i.b16 %v843, %v842
        %845 = vrot.lane.b32.xlu0 %v676, 96
        %v846 = vpop.permute.xlu0 %845
        %847 = vrot.lane.b32.xlu0 %v679, 96
        %v848 = vpop.permute.xlu0 %847
        %849 = vrot.lane.b32.xlu0 %v681, 96
        %v850 = vpop.permute.xlu0 %849
        %851 = vrot.lane.b32.xlu0 %v683, 96
        %v852 = vpop.permute.xlu0 %851
        %v855 = vunpack.c.l.s4 1983009808
        %v856 = vunpack.c.0.s8 %v855
        %v857 = vlaneseq
        %v858 = vshrl.u32 %v857, 7
        %v859 = vsub.s32 %v856, %v858
        %v860 = vrot.slane %v846, %v859
        %v863 = vunpack.c.l.s4 1983009808
        %v864 = vunpack.c.0.s8 %v863
        %v865 = vlaneseq
        %v866 = vshrl.u32 %v865, 7
        %v867 = vsub.s32 %v864, %v866
        %v868 = vrot.slane %v850, %v867
        %v869 = vcombine.low %v860, %v868
        %v870 = vcombine.high %v860, %v868
        %v872 = vunpack.c.l.s4 1934713408
        %v873 = vunpack.c.0.s8 %v872
        %v874 = vlaneseq
        %v875 = vshrl.u32 %v874, 7
        %v876 = vsub.s32 %v873, %v875
        %v877 = vrot.slane %v869, %v876
        %v879 = vunpack.c.l.s4 1934713408
        %v880 = vunpack.c.0.s8 %v879
        %v881 = vlaneseq
        %v882 = vshrl.u32 %v881, 7
        %v883 = vsub.s32 %v880, %v882
        %v884 = vrot.slane %v870, %v883
        %v885 = vcombine.high %v877, 0
        %v886 = vcombine.high %v884, 0
        %v889 = vunpack.c.l.s4 1983009808
        %v890 = vunpack.c.0.s8 %v889
        %v891 = vlaneseq
        %v892 = vshrl.u32 %v891, 7
        %v893 = vsub.s32 %v890, %v892
        %v894 = vrot.slane %v848, %v893
        %v897 = vunpack.c.l.s4 1983009808
        %v898 = vunpack.c.0.s8 %v897
        %v899 = vlaneseq
        %v900 = vshrl.u32 %v899, 7
        %v901 = vsub.s32 %v898, %v900
        %v902 = vrot.slane %v852, %v901
        %v903 = vcombine.low %v894, %v902
        %v904 = vcombine.high %v894, %v902
        %v906 = vunpack.c.l.s4 1934713408
        %v907 = vunpack.c.0.s8 %v906
        %v908 = vlaneseq
        %v909 = vshrl.u32 %v908, 7
        %v910 = vsub.s32 %v907, %v909
        %v911 = vrot.slane %v903, %v910
        %v913 = vunpack.c.l.s4 1934713408
        %v914 = vunpack.c.0.s8 %v913
        %v915 = vlaneseq
        %v916 = vshrl.u32 %v915, 7
        %v917 = vsub.s32 %v914, %v916
        %v918 = vrot.slane %v904, %v917
        %v919 = vcombine.high %v911, 0
        %v920 = vcombine.high %v918, 0
        %v923 = vpack.i.b16 %v911, %v877
        %v925 = vshrl.u32 %v877, 16
        %v926 = vshrl.u32 %v911, 16
        %v927 = vpack.i.b16 %v926, %v925
        %v931 = vpack.i.b16 %v919, %v885
        %v933 = vshrl.u32 %v885, 16
        %v934 = vshrl.u32 %v919, 16
        %v935 = vpack.i.b16 %v934, %v933
        %v939 = vpack.i.b16 %v918, %v884
        %v941 = vshrl.u32 %v884, 16
        %v942 = vshrl.u32 %v918, 16
        %v943 = vpack.i.b16 %v942, %v941
        %v947 = vpack.i.b16 %v920, %v886
        %v949 = vshrl.u32 %v886, 16
        %v950 = vshrl.u32 %v920, 16
        %v951 = vpack.i.b16 %v950, %v949
        %v953 = vcombine.low %v923, %v939
        %v955 = vunpack.c.l.s4 1983009808
        %v956 = vunpack.c.0.s8 %v955
        %v957 = vlaneseq
        %v958 = vshrl.u32 %v957, 7
        %v959 = vsub.s32 %v956, %v958
        %v960 = vrot.slane %v953, %v959
        %v961 = vcombine.low %v931, %v947
        %v963 = vunpack.c.l.s4 1983009808
        %v964 = vunpack.c.0.s8 %v963
        %v965 = vlaneseq
        %v966 = vshrl.u32 %v965, 7
        %v967 = vsub.s32 %v964, %v966
        %v968 = vrot.slane %v961, %v967
        %v969 = vcombine.low %v960, %v968
        %v971 = vunpack.c.l.s4 1934713408
        %v972 = vunpack.c.0.s8 %v971
        %v973 = vlaneseq
        %v974 = vshrl.u32 %v973, 7
        %v975 = vsub.s32 %v972, %v974
        %v976 = vrot.slane %v969, %v975
        %v977 = vcombine.high %v976, 0
        %v978 = vcombine.low %v927, %v943
        %v980 = vunpack.c.l.s4 1983009808
        %v981 = vunpack.c.0.s8 %v980
        %v982 = vlaneseq
        %v983 = vshrl.u32 %v982, 7
        %v984 = vsub.s32 %v981, %v983
        %v985 = vrot.slane %v978, %v984
        %v986 = vcombine.low %v935, %v951
        %v988 = vunpack.c.l.s4 1983009808
        %v989 = vunpack.c.0.s8 %v988
        %v990 = vlaneseq
        %v991 = vshrl.u32 %v990, 7
        %v992 = vsub.s32 %v989, %v991
        %v993 = vrot.slane %v986, %v992
        %v994 = vcombine.low %v985, %v993
        %v996 = vunpack.c.l.s4 1934713408
        %v997 = vunpack.c.0.s8 %v996
        %v998 = vlaneseq
        %v999 = vshrl.u32 %v998, 7
        %v1000 = vsub.s32 %v997, %v999
        %v1001 = vrot.slane %v994, %v1000
        %v1002 = vcombine.high %v1001, 0
        %v1005 = vpack.i.b16 %v1001, %v976
        %v1006 = vshrl.u32 %v976, 16
        %v1007 = vshrl.u32 %v1001, 16
        %v1008 = vpack.i.b16 %v1007, %v1006
        %v1011 = vpack.i.b16 %v1002, %v977
        %v1012 = vshrl.u32 %v977, 16
        %v1013 = vshrl.u32 %v1002, 16
        %v1014 = vpack.i.b16 %v1013, %v1012
        %1015 = vrot.lane.b32.xlu0 %v676, 64
        %v1016 = vpop.permute.xlu0 %1015
        %1017 = vrot.lane.b32.xlu0 %v679, 64
        %v1018 = vpop.permute.xlu0 %1017
        %1019 = vrot.lane.b32.xlu0 %v681, 64
        %v1020 = vpop.permute.xlu0 %1019
        %1021 = vrot.lane.b32.xlu0 %v683, 64
        %v1022 = vpop.permute.xlu0 %1021
        %v1025 = vunpack.c.l.s4 1983009808
        %v1026 = vunpack.c.0.s8 %v1025
        %v1027 = vlaneseq
        %v1028 = vshrl.u32 %v1027, 7
        %v1029 = vsub.s32 %v1026, %v1028
        %v1030 = vrot.slane %v1016, %v1029
        %v1033 = vunpack.c.l.s4 1983009808
        %v1034 = vunpack.c.0.s8 %v1033
        %v1035 = vlaneseq
        %v1036 = vshrl.u32 %v1035, 7
        %v1037 = vsub.s32 %v1034, %v1036
        %v1038 = vrot.slane %v1020, %v1037
        %v1039 = vcombine.low %v1030, %v1038
        %v1040 = vcombine.high %v1030, %v1038
        %v1042 = vunpack.c.l.s4 1934713408
        %v1043 = vunpack.c.0.s8 %v1042
        %v1044 = vlaneseq
        %v1045 = vshrl.u32 %v1044, 7
        %v1046 = vsub.s32 %v1043, %v1045
        %v1047 = vrot.slane %v1039, %v1046
        %v1049 = vunpack.c.l.s4 1934713408
        %v1050 = vunpack.c.0.s8 %v1049
        %v1051 = vlaneseq
        %v1052 = vshrl.u32 %v1051, 7
        %v1053 = vsub.s32 %v1050, %v1052
        %v1054 = vrot.slane %v1040, %v1053
        %v1055 = vcombine.high %v1047, 0
        %v1056 = vcombine.high %v1054, 0
        %v1059 = vunpack.c.l.s4 1983009808
        %v1060 = vunpack.c.0.s8 %v1059
        %v1061 = vlaneseq
        %v1062 = vshrl.u32 %v1061, 7
        %v1063 = vsub.s32 %v1060, %v1062
        %v1064 = vrot.slane %v1018, %v1063
        %v1067 = vunpack.c.l.s4 1983009808
        %v1068 = vunpack.c.0.s8 %v1067
        %v1069 = vlaneseq
        %v1070 = vshrl.u32 %v1069, 7
        %v1071 = vsub.s32 %v1068, %v1070
        %v1072 = vrot.slane %v1022, %v1071
        %v1073 = vcombine.low %v1064, %v1072
        %v1074 = vcombine.high %v1064, %v1072
        %v1076 = vunpack.c.l.s4 1934713408
        %v1077 = vunpack.c.0.s8 %v1076
        %v1078 = vlaneseq
        %v1079 = vshrl.u32 %v1078, 7
        %v1080 = vsub.s32 %v1077, %v1079
        %v1081 = vrot.slane %v1073, %v1080
        %v1083 = vunpack.c.l.s4 1934713408
        %v1084 = vunpack.c.0.s8 %v1083
        %v1085 = vlaneseq
        %v1086 = vshrl.u32 %v1085, 7
        %v1087 = vsub.s32 %v1084, %v1086
        %v1088 = vrot.slane %v1074, %v1087
        %v1089 = vcombine.high %v1081, 0
        %v1090 = vcombine.high %v1088, 0
        %v1093 = vpack.i.b16 %v1081, %v1047
        %v1095 = vshrl.u32 %v1047, 16
        %v1096 = vshrl.u32 %v1081, 16
        %v1097 = vpack.i.b16 %v1096, %v1095
        %v1101 = vpack.i.b16 %v1089, %v1055
        %v1103 = vshrl.u32 %v1055, 16
        %v1104 = vshrl.u32 %v1089, 16
        %v1105 = vpack.i.b16 %v1104, %v1103
        %v1109 = vpack.i.b16 %v1088, %v1054
        %v1111 = vshrl.u32 %v1054, 16
        %v1112 = vshrl.u32 %v1088, 16
        %v1113 = vpack.i.b16 %v1112, %v1111
        %v1117 = vpack.i.b16 %v1090, %v1056
        %v1119 = vshrl.u32 %v1056, 16
        %v1120 = vshrl.u32 %v1090, 16
        %v1121 = vpack.i.b16 %v1120, %v1119
        %v1123 = vcombine.low %v1093, %v1109
        %v1125 = vunpack.c.l.s4 1983009808
        %v1126 = vunpack.c.0.s8 %v1125
        %v1127 = vlaneseq
        %v1128 = vshrl.u32 %v1127, 7
        %v1129 = vsub.s32 %v1126, %v1128
        %v1130 = vrot.slane %v1123, %v1129
        %v1131 = vcombine.low %v1101, %v1117
        %v1133 = vunpack.c.l.s4 1983009808
        %v1134 = vunpack.c.0.s8 %v1133
        %v1135 = vlaneseq
        %v1136 = vshrl.u32 %v1135, 7
        %v1137 = vsub.s32 %v1134, %v1136
        %v1138 = vrot.slane %v1131, %v1137
        %v1139 = vcombine.low %v1130, %v1138
        %v1141 = vunpack.c.l.s4 1934713408
        %v1142 = vunpack.c.0.s8 %v1141
        %v1143 = vlaneseq
        %v1144 = vshrl.u32 %v1143, 7
        %v1145 = vsub.s32 %v1142, %v1144
        %v1146 = vrot.slane %v1139, %v1145
        %v1147 = vcombine.high %v1146, 0
        %v1148 = vcombine.low %v1097, %v1113
        %v1150 = vunpack.c.l.s4 1983009808
        %v1151 = vunpack.c.0.s8 %v1150
        %v1152 = vlaneseq
        %v1153 = vshrl.u32 %v1152, 7
        %v1154 = vsub.s32 %v1151, %v1153
        %v1155 = vrot.slane %v1148, %v1154
        %v1156 = vcombine.low %v1105, %v1121
        %v1158 = vunpack.c.l.s4 1983009808
        %v1159 = vunpack.c.0.s8 %v1158
        %v1160 = vlaneseq
        %v1161 = vshrl.u32 %v1160, 7
        %v1162 = vsub.s32 %v1159, %v1161
        %v1163 = vrot.slane %v1156, %v1162
        %v1164 = vcombine.low %v1155, %v1163
        %v1166 = vunpack.c.l.s4 1934713408
        %v1167 = vunpack.c.0.s8 %v1166
        %v1168 = vlaneseq
        %v1169 = vshrl.u32 %v1168, 7
        %v1170 = vsub.s32 %v1167, %v1169
        %v1171 = vrot.slane %v1164, %v1170
        %v1172 = vcombine.high %v1171, 0
        %v1175 = vpack.i.b16 %v1171, %v1146
        %v1176 = vshrl.u32 %v1146, 16
        %v1177 = vshrl.u32 %v1171, 16
        %v1178 = vpack.i.b16 %v1177, %v1176
        %v1181 = vpack.i.b16 %v1172, %v1147
        %v1182 = vshrl.u32 %v1147, 16
        %v1183 = vshrl.u32 %v1172, 16
        %v1184 = vpack.i.b16 %v1183, %v1182
        %vm1185 = vcmask 64512
        %v1187 = vsel %vm1185, %v835, 0
        %v1190 = vsel %vm1185, %v1005, 0
        %1192 = vmatprep.subr.bf16.mxu0 0
        %1193 = vmatpush1.bf16.xpose.msra.mxu0 %v1190
        %1194 = vmatprep.subr.bf16.mxu0 0
        %1195 = vmatpush1.bf16.xpose.msra.mxu0 0
        %1196 = vmatprep.subr.bf16.mxu0 0
        %1197 = vmatpush1.bf16.xpose.msra.mxu0 0
        %1198 = vmatprep.subr.bf16.mxu0 0
        %1199 = vmatpush1.bf16.xpose.msra.mxu0 0
        %1200 = vmatprep.subr.bf16.mxu0 0
        %1201 = vmatpush1.bf16.xpose.msra.mxu0 0
        %1202 = vmatprep.subr.bf16.mxu0 0
        %1203 = vmatpush1.bf16.xpose.msra.mxu0 0
        %1204 = vmatprep.subr.bf16.mxu0 0
        %1205 = vmatpush1.bf16.xpose.msra.mxu0 0
        %1206 = vmatprep.subr.bf16.mxu0 0
        %1207 = vmatpush1.bf16.xpose.msra.mxu0 0
        %1208 = vmatprep.subr.bf16.mxu0 0
        %1209 = vmatpush1.bf16.xpose.msra.mxu0 0
        %1210 = vmatprep.subr.bf16.mxu0 0
        %1211 = vmatpush1.bf16.xpose.msra.mxu0 0
        %1212 = vmatprep.subr.bf16.mxu0 0
        %1213 = vmatpush1.bf16.xpose.msra.mxu0 0
        %1214 = vmatprep.subr.bf16.mxu0 0
        %1215 = vmatpush1.bf16.xpose.msra.mxu0 0
        %1216 = vmatprep.subr.bf16.mxu0 0
        %1217 = vmatpush1.bf16.xpose.msra.mxu0 0
        %1218 = vmatprep.subr.bf16.mxu0 0
        %1219 = vmatpush1.bf16.xpose.msra.mxu0 0
        %1220 = vmatprep.subr.bf16.mxu0 0
        %1221 = vmatpush1.bf16.xpose.msra.mxu0 0
        %1222 = vmatprep.subr.bf16.mxu0 0
        %1223 = vmatpush1.bf16.xpose.msra.mxu0 0
        %1224 = vmatprep.mubr.bf16.mxu0 0
        %1225 = vmatmul.mubr.bf16.gmra.mrb[0].mxu0 %v1187
        %v1226 = vpop.f32.mrb[0].mxu0
        %v1227 = vadd.f32 0.0, %v1226
        %v1228 = vpop.f32.mrb[0].mxu0
        %v1229 = vpop.f32.mrb[0].mxu0
        %v1230 = vpop.f32.mrb[0].mxu0
        %1231 = vdwg.mxu0
        %v1233 = vsel %vm1185, %v838, 0
        %v1236 = vsel %vm1185, %v1008, 0
        %1238 = vmatprep.subr.bf16.mxu0 0
        %1239 = vmatpush1.bf16.xpose.msra.mxu0 %v1236
        %1240 = vmatprep.subr.bf16.mxu0 0
        %1241 = vmatpush1.bf16.xpose.msra.mxu0 0
        %1242 = vmatprep.subr.bf16.mxu0 0
        %1243 = vmatpush1.bf16.xpose.msra.mxu0 0
        %1244 = vmatprep.subr.bf16.mxu0 0
        %1245 = vmatpush1.bf16.xpose.msra.mxu0 0
        %1246 = vmatprep.subr.bf16.mxu0 0
        %1247 = vmatpush1.bf16.xpose.msra.mxu0 0
        %1248 = vmatprep.subr.bf16.mxu0 0
        %1249 = vmatpush1.bf16.xpose.msra.mxu0 0
        %1250 = vmatprep.subr.bf16.mxu0 0
        %1251 = vmatpush1.bf16.xpose.msra.mxu0 0
        %1252 = vmatprep.subr.bf16.mxu0 0
        %1253 = vmatpush1.bf16.xpose.msra.mxu0 0
        %1254 = vmatprep.subr.bf16.mxu0 0
        %1255 = vmatpush1.bf16.xpose.msra.mxu0 0
        %1256 = vmatprep.subr.bf16.mxu0 0
        %1257 = vmatpush1.bf16.xpose.msra.mxu0 0
        %1258 = vmatprep.subr.bf16.mxu0 0
        %1259 = vmatpush1.bf16.xpose.msra.mxu0 0
        %1260 = vmatprep.subr.bf16.mxu0 0
        %1261 = vmatpush1.bf16.xpose.msra.mxu0 0
        %1262 = vmatprep.subr.bf16.mxu0 0
        %1263 = vmatpush1.bf16.xpose.msra.mxu0 0
        %1264 = vmatprep.subr.bf16.mxu0 0
        %1265 = vmatpush1.bf16.xpose.msra.mxu0 0
        %1266 = vmatprep.subr.bf16.mxu0 0
        %1267 = vmatpush1.bf16.xpose.msra.mxu0 0
        %1268 = vmatprep.subr.bf16.mxu0 0
        %1269 = vmatpush1.bf16.xpose.msra.mxu0 0
        %1270 = vmatprep.mubr.bf16.mxu0 0
        %1271 = vmatmul.mubr.bf16.gmra.mrb[0].mxu0 %v1233
        %v1272 = vpop.f32.mrb[0].mxu0
        %v1273 = vadd.f32 0.0, %v1272
        %v1274 = vpop.f32.mrb[0].mxu0
        %v1275 = vpop.f32.mrb[0].mxu0
        %v1276 = vpop.f32.mrb[0].mxu0
        %1277 = vdwg.mxu0
        %v1279 = vsel %vm1185, %v841, 0
        %v1282 = vsel %vm1185, %v1011, 0
        %1284 = vmatprep.subr.bf16.mxu0 0
        %1285 = vmatpush1.bf16.xpose.msra.mxu0 %v1282
        %1286 = vmatprep.subr.bf16.mxu0 0
        %1287 = vmatpush1.bf16.xpose.msra.mxu0 0
        %1288 = vmatprep.subr.bf16.mxu0 0
        %1289 = vmatpush1.bf16.xpose.msra.mxu0 0
        %1290 = vmatprep.subr.bf16.mxu0 0
        %1291 = vmatpush1.bf16.xpose.msra.mxu0 0
        %1292 = vmatprep.subr.bf16.mxu0 0
        %1293 = vmatpush1.bf16.xpose.msra.mxu0 0
        %1294 = vmatprep.subr.bf16.mxu0 0
        %1295 = vmatpush1.bf16.xpose.msra.mxu0 0
        %1296 = vmatprep.subr.bf16.mxu0 0
        %1297 = vmatpush1.bf16.xpose.msra.mxu0 0
        %1298 = vmatprep.subr.bf16.mxu0 0
        %1299 = vmatpush1.bf16.xpose.msra.mxu0 0
        %1300 = vmatprep.subr.bf16.mxu0 0
        %1301 = vmatpush1.bf16.xpose.msra.mxu0 0
        %1302 = vmatprep.subr.bf16.mxu0 0
        %1303 = vmatpush1.bf16.xpose.msra.mxu0 0
        %1304 = vmatprep.subr.bf16.mxu0 0
        %1305 = vmatpush1.bf16.xpose.msra.mxu0 0
        %1306 = vmatprep.subr.bf16.mxu0 0
        %1307 = vmatpush1.bf16.xpose.msra.mxu0 0
        %1308 = vmatprep.subr.bf16.mxu0 0
        %1309 = vmatpush1.bf16.xpose.msra.mxu0 0
        %1310 = vmatprep.subr.bf16.mxu0 0
        %1311 = vmatpush1.bf16.xpose.msra.mxu0 0
        %1312 = vmatprep.subr.bf16.mxu0 0
        %1313 = vmatpush1.bf16.xpose.msra.mxu0 0
        %1314 = vmatprep.subr.bf16.mxu0 0
        %1315 = vmatpush1.bf16.xpose.msra.mxu0 0
        %1316 = vmatprep.mubr.bf16.mxu0 0
        %1317 = vmatmul.mubr.bf16.gmra.mrb[0].mxu0 %v1279
        %v1318 = vpop.f32.mrb[0].mxu0
        %v1319 = vadd.f32 0.0, %v1318
        %v1320 = vpop.f32.mrb[0].mxu0
        %v1321 = vpop.f32.mrb[0].mxu0
        %v1322 = vpop.f32.mrb[0].mxu0
        %1323 = vdwg.mxu0
        %v1325 = vsel %vm1185, %v844, 0
        %v1328 = vsel %vm1185, %v1014, 0
        %1330 = vmatprep.subr.bf16.mxu0 0
        %1331 = vmatpush1.bf16.xpose.msra.mxu0 %v1328
        %1332 = vmatprep.subr.bf16.mxu0 0
        %1333 = vmatpush1.bf16.xpose.msra.mxu0 0
        %1334 = vmatprep.subr.bf16.mxu0 0
        %1335 = vmatpush1.bf16.xpose.msra.mxu0 0
        %1336 = vmatprep.subr.bf16.mxu0 0
        %1337 = vmatpush1.bf16.xpose.msra.mxu0 0
        %1338 = vmatprep.subr.bf16.mxu0 0
        %1339 = vmatpush1.bf16.xpose.msra.mxu0 0
        %1340 = vmatprep.subr.bf16.mxu0 0
        %1341 = vmatpush1.bf16.xpose.msra.mxu0 0
        %1342 = vmatprep.subr.bf16.mxu0 0
        %1343 = vmatpush1.bf16.xpose.msra.mxu0 0
        %1344 = vmatprep.subr.bf16.mxu0 0
        %1345 = vmatpush1.bf16.xpose.msra.mxu0 0
        %1346 = vmatprep.subr.bf16.mxu0 0
        %1347 = vmatpush1.bf16.xpose.msra.mxu0 0
        %1348 = vmatprep.subr.bf16.mxu0 0
        %1349 = vmatpush1.bf16.xpose.msra.mxu0 0
        %1350 = vmatprep.subr.bf16.mxu0 0
        %1351 = vmatpush1.bf16.xpose.msra.mxu0 0
        %1352 = vmatprep.subr.bf16.mxu0 0
        %1353 = vmatpush1.bf16.xpose.msra.mxu0 0
        %1354 = vmatprep.subr.bf16.mxu0 0
        %1355 = vmatpush1.bf16.xpose.msra.mxu0 0
        %1356 = vmatprep.subr.bf16.mxu0 0
        %1357 = vmatpush1.bf16.xpose.msra.mxu0 0
        %1358 = vmatprep.subr.bf16.mxu0 0
        %1359 = vmatpush1.bf16.xpose.msra.mxu0 0
        %1360 = vmatprep.subr.bf16.mxu0 0
        %1361 = vmatpush1.bf16.xpose.msra.mxu0 0
        %1362 = vmatprep.mubr.bf16.mxu0 0
        %1363 = vmatmul.mubr.bf16.gmra.mrb[0].mxu0 %v1325
        %v1364 = vpop.f32.mrb[0].mxu0
        %v1365 = vadd.f32 0.0, %v1364
        %v1366 = vpop.f32.mrb[0].mxu0
        %v1367 = vpop.f32.mrb[0].mxu0
        %v1368 = vpop.f32.mrb[0].mxu0
        %1369 = vdwg.mxu0
        %v1370 = vlaneseq
        %v1371 = vshrl.u32 %v1370, 7
        %v1372 = vlaneseq
        %v1373 = vand.u32 %v1372, 127
        %vm1374 = vcmp.le.s32.totalorder %v1373, %v1371
        %v1375 = vsel %vm1374, 1, 0
        %vm1376 = vcmp.eq.s32.totalorder %v1375, 1
        %v1377 = vsel %vm1376, %v1227, -inf
        %v1378 = vsel %vm1376, %v1273, -inf
        %v1379 = vsel %vm1376, %v1319, -inf
        %v1380 = vsel %vm1376, %v1365, -inf
        %v1381 = vsel %vm1185, %v1377, -inf
        %1382 = vmax.xlane.f32.xlu0 %v1381
        %v1383 = vpop.xlane.xlu0 %1382
        %v1384 = vsel %vm1185, %v1378, -inf
        %1385 = vmax.xlane.f32.xlu0 %v1384
        %v1386 = vpop.xlane.xlu0 %1385
        %v1387 = vsel %vm1185, %v1379, -inf
        %1388 = vmax.xlane.f32.xlu0 %v1387
        %v1389 = vpop.xlane.xlu0 %1388
        %v1390 = vsel %vm1185, %v1380, -inf
        %1391 = vmax.xlane.f32.xlu0 %v1390
        %v1392 = vpop.xlane.xlu0 %1391
        %v1393 = vsub.f32 %v1377, %v1383
        %v1394 = vsub.f32 %v1378, %v1386
        %v1395 = vsub.f32 %v1379, %v1389
        %v1396 = vsub.f32 %v1380, %v1392
        %v1397 = vmul.f32 %v1393, 1.442695
        %v1398 = vpow.pop %v1397
        %v1399 = vmul.f32 %v1394, 1.442695
        %v1400 = vpow.pop %v1399
        %v1401 = vmul.f32 %v1395, 1.442695
        %v1402 = vpow.pop %v1401
        %v1403 = vmul.f32 %v1396, 1.442695
        %v1404 = vpow.pop %v1403
        %v1405 = vsel %vm1185, %v1398, 0.0
        %1406 = vadd.xlane.f32.xlu0 %v1405
        %v1407 = vpop.xlane.xlu0 %1406
        %v1408 = vsel %vm1185, %v1400, 0.0
        %1409 = vadd.xlane.f32.xlu0 %v1408
        %v1410 = vpop.xlane.xlu0 %1409
        %v1411 = vsel %vm1185, %v1402, 0.0
        %1412 = vadd.xlane.f32.xlu0 %v1411
        %v1413 = vpop.xlane.xlu0 %1412
        %v1414 = vsel %vm1185, %v1404, 0.0
        %1415 = vadd.xlane.f32.xlu0 %v1414
        %v1416 = vpop.xlane.xlu0 %1415
        %v1417 = vrcp.pop %v1407
        %v1418 = vrcp.pop %v1410
        %v1419 = vrcp.pop %v1413
        %v1420 = vrcp.pop %v1416
        %v1421 = vmul.f32 %v1407, %v1417
        %v1422 = vmul.f32 %v1410, %v1418
        %v1423 = vmul.f32 %v1413, %v1419
        %v1424 = vmul.f32 %v1416, %v1420
        %v1425 = vsub.f32 2.0, %v1421
        %v1426 = vsub.f32 2.0, %v1422
        %v1427 = vsub.f32 2.0, %v1423
        %v1428 = vsub.f32 2.0, %v1424
        %v1429 = vmul.f32 %v1417, %v1425
        %v1430 = vmul.f32 %v1418, %v1426
        %v1431 = vmul.f32 %v1419, %v1427
        %v1432 = vmul.f32 %v1420, %v1428
        %v1433 = vmul.f32 %v1398, %v1429
        %v1434 = vmul.f32 %v1400, %v1430
        %v1435 = vmul.f32 %v1402, %v1431
        %v1436 = vmul.f32 %v1404, %v1432
        %v1437 = vpack.c.bf16 %v1433, %v1433
        %v1438 = vpack.c.bf16 %v1434, %v1434
        %v1439 = vpack.c.bf16 %v1435, %v1435
        %v1440 = vpack.c.bf16 %v1436, %v1436
        %vm1441 = vcmask 60416
        %1442 = vst.msk [vmem:[%s612] sm:$0xf] %vm1441, %v1437
        %1443 = vst.msk [vmem:[%s612 + $0x4] sm:$0xf] %vm1441, %v1438
        %1444 = vst.msk [vmem:[%s612 + $0x8] sm:$0xf] %vm1441, %v1439
        %1445 = vst.msk [vmem:[%s612 + $0xc] sm:$0xf] %vm1441, %v1440
        %v1447 = vsel %vm1185, %v1437, 0
        %vm1449 = vcmask 1043456
        %v1451 = vsel %vm1449, %v1175, 0
        %1453 = vmatprep.subr.bf16.mxu0 0
        %1454 = vmatpush1.bf16.msra.mxu0 %v1451
        %1455 = vmatprep.subr.bf16.mxu0 0
        %1456 = vmatpush1.bf16.msra.mxu0 0
        %1457 = vmatprep.subr.bf16.mxu0 0
        %1458 = vmatpush1.bf16.msra.mxu0 0
        %1459 = vmatprep.subr.bf16.mxu0 0
        %1460 = vmatpush1.bf16.msra.mxu0 0
        %1461 = vmatprep.subr.bf16.mxu0 0
        %1462 = vmatpush1.bf16.msra.mxu0 0
        %1463 = vmatprep.subr.bf16.mxu0 0
        %1464 = vmatpush1.bf16.msra.mxu0 0
        %1465 = vmatprep.subr.bf16.mxu0 0
        %1466 = vmatpush1.bf16.msra.mxu0 0
        %1467 = vmatprep.subr.bf16.mxu0 0
        %1468 = vmatpush1.bf16.msra.mxu0 0
        %1469 = vmatprep.subr.bf16.mxu0 0
        %1470 = vmatpush1.bf16.msra.mxu0 0
        %1471 = vmatprep.subr.bf16.mxu0 0
        %1472 = vmatpush1.bf16.msra.mxu0 0
        %1473 = vmatprep.subr.bf16.mxu0 0
        %1474 = vmatpush1.bf16.msra.mxu0 0
        %1475 = vmatprep.subr.bf16.mxu0 0
        %1476 = vmatpush1.bf16.msra.mxu0 0
        %1477 = vmatprep.subr.bf16.mxu0 0
        %1478 = vmatpush1.bf16.msra.mxu0 0
        %1479 = vmatprep.subr.bf16.mxu0 0
        %1480 = vmatpush1.bf16.msra.mxu0 0
        %1481 = vmatprep.subr.bf16.mxu0 0
        %1482 = vmatpush1.bf16.msra.mxu0 0
        %1483 = vmatprep.subr.bf16.mxu0 0
        %1484 = vmatpush1.bf16.msra.mxu0 0
        %1485 = vmatprep.mubr.bf16.mxu0 0
        %1486 = vmatmul.mubr.bf16.gmra.mrb[0].mxu0 %v1447
        %v1487 = vpop.f32.mrb[0].mxu0
        %v1488 = vadd.f32 0.0, %v1487
        %v1489 = vpop.f32.mrb[0].mxu0
        %v1490 = vpop.f32.mrb[0].mxu0
        %v1491 = vpop.f32.mrb[0].mxu0
        %1492 = vdwg.mxu0
        %v1494 = vsel %vm1185, %v1438, 0
        %v1497 = vsel %vm1449, %v1178, 0
        %1499 = vmatprep.subr.bf16.mxu0 0
        %1500 = vmatpush1.bf16.msra.mxu0 %v1497
        %1501 = vmatprep.subr.bf16.mxu0 0
        %1502 = vmatpush1.bf16.msra.mxu0 0
        %1503 = vmatprep.subr.bf16.mxu0 0
        %1504 = vmatpush1.bf16.msra.mxu0 0
        %1505 = vmatprep.subr.bf16.mxu0 0
        %1506 = vmatpush1.bf16.msra.mxu0 0
        %1507 = vmatprep.subr.bf16.mxu0 0
        %1508 = vmatpush1.bf16.msra.mxu0 0
        %1509 = vmatprep.subr.bf16.mxu0 0
        %1510 = vmatpush1.bf16.msra.mxu0 0
        %1511 = vmatprep.subr.bf16.mxu0 0
        %1512 = vmatpush1.bf16.msra.mxu0 0
        %1513 = vmatprep.subr.bf16.mxu0 0
        %1514 = vmatpush1.bf16.msra.mxu0 0
        %1515 = vmatprep.subr.bf16.mxu0 0
        %1516 = vmatpush1.bf16.msra.mxu0 0
        %1517 = vmatprep.subr.bf16.mxu0 0
        %1518 = vmatpush1.bf16.msra.mxu0 0
        %1519 = vmatprep.subr.bf16.mxu0 0
        %1520 = vmatpush1.bf16.msra.mxu0 0
        %1521 = vmatprep.subr.bf16.mxu0 0
        %1522 = vmatpush1.bf16.msra.mxu0 0
        %1523 = vmatprep.subr.bf16.mxu0 0
        %1524 = vmatpush1.bf16.msra.mxu0 0
        %1525 = vmatprep.subr.bf16.mxu0 0
        %1526 = vmatpush1.bf16.msra.mxu0 0
        %1527 = vmatprep.subr.bf16.mxu0 0
        %1528 = vmatpush1.bf16.msra.mxu0 0
        %1529 = vmatprep.subr.bf16.mxu0 0
        %1530 = vmatpush1.bf16.msra.mxu0 0
        %1531 = vmatprep.mubr.bf16.mxu0 0
        %1532 = vmatmul.mubr.bf16.gmra.mrb[0].mxu0 %v1494
        %v1533 = vpop.f32.mrb[0].mxu0
        %v1534 = vadd.f32 0.0, %v1533
        %v1535 = vpop.f32.mrb[0].mxu0
        %v1536 = vpop.f32.mrb[0].mxu0
        %v1537 = vpop.f32.mrb[0].mxu0
        %1538 = vdwg.mxu0
        %v1540 = vsel %vm1185, %v1439, 0
        %v1543 = vsel %vm1449, %v1181, 0
        %1545 = vmatprep.subr.bf16.mxu0 0
        %1546 = vmatpush1.bf16.msra.mxu0 %v1543
        %1547 = vmatprep.subr.bf16.mxu0 0
        %1548 = vmatpush1.bf16.msra.mxu0 0
        %1549 = vmatprep.subr.bf16.mxu0 0
        %1550 = vmatpush1.bf16.msra.mxu0 0
        %1551 = vmatprep.subr.bf16.mxu0 0
        %1552 = vmatpush1.bf16.msra.mxu0 0
        %1553 = vmatprep.subr.bf16.mxu0 0
        %1554 = vmatpush1.bf16.msra.mxu0 0
        %1555 = vmatprep.subr.bf16.mxu0 0
        %1556 = vmatpush1.bf16.msra.mxu0 0
        %1557 = vmatprep.subr.bf16.mxu0 0
        %1558 = vmatpush1.bf16.msra.mxu0 0
        %1559 = vmatprep.subr.bf16.mxu0 0
        %1560 = vmatpush1.bf16.msra.mxu0 0
        %1561 = vmatprep.subr.bf16.mxu0 0
        %1562 = vmatpush1.bf16.msra.mxu0 0
        %1563 = vmatprep.subr.bf16.mxu0 0
        %1564 = vmatpush1.bf16.msra.mxu0 0
        %1565 = vmatprep.subr.bf16.mxu0 0
        %1566 = vmatpush1.bf16.msra.mxu0 0
        %1567 = vmatprep.subr.bf16.mxu0 0
        %1568 = vmatpush1.bf16.msra.mxu0 0
        %1569 = vmatprep.subr.bf16.mxu0 0
        %1570 = vmatpush1.bf16.msra.mxu0 0
        %1571 = vmatprep.subr.bf16.mxu0 0
        %1572 = vmatpush1.bf16.msra.mxu0 0
        %1573 = vmatprep.subr.bf16.mxu0 0
        %1574 = vmatpush1.bf16.msra.mxu0 0
        %1575 = vmatprep.subr.bf16.mxu0 0
        %1576 = vmatpush1.bf16.msra.mxu0 0
        %1577 = vmatprep.mubr.bf16.mxu0 0
        %1578 = vmatmul.mubr.bf16.gmra.mrb[0].mxu0 %v1540
        %v1579 = vpop.f32.mrb[0].mxu0
        %v1580 = vadd.f32 0.0, %v1579
        %v1581 = vpop.f32.mrb[0].mxu0
        %v1582 = vpop.f32.mrb[0].mxu0
        %v1583 = vpop.f32.mrb[0].mxu0
        %1584 = vdwg.mxu0
        %v1586 = vsel %vm1185, %v1440, 0
        %v1589 = vsel %vm1449, %v1184, 0
        %1591 = vmatprep.subr.bf16.mxu0 0
        %1592 = vmatpush1.bf16.msra.mxu0 %v1589
        %1593 = vmatprep.subr.bf16.mxu0 0
        %1594 = vmatpush1.bf16.msra.mxu0 0
        %1595 = vmatprep.subr.bf16.mxu0 0
        %1596 = vmatpush1.bf16.msra.mxu0 0
        %1597 = vmatprep.subr.bf16.mxu0 0
        %1598 = vmatpush1.bf16.msra.mxu0 0
        %1599 = vmatprep.subr.bf16.mxu0 0
        %1600 = vmatpush1.bf16.msra.mxu0 0
        %1601 = vmatprep.subr.bf16.mxu0 0
        %1602 = vmatpush1.bf16.msra.mxu0 0
        %1603 = vmatprep.subr.bf16.mxu0 0
        %1604 = vmatpush1.bf16.msra.mxu0 0
        %1605 = vmatprep.subr.bf16.mxu0 0
        %1606 = vmatpush1.bf16.msra.mxu0 0
        %1607 = vmatprep.subr.bf16.mxu0 0
        %1608 = vmatpush1.bf16.msra.mxu0 0
        %1609 = vmatprep.subr.bf16.mxu0 0
        %1610 = vmatpush1.bf16.msra.mxu0 0
        %1611 = vmatprep.subr.bf16.mxu0 0
        %1612 = vmatpush1.bf16.msra.mxu0 0
        %1613 = vmatprep.subr.bf16.mxu0 0
        %1614 = vmatpush1.bf16.msra.mxu0 0
        %1615 = vmatprep.subr.bf16.mxu0 0
        %1616 = vmatpush1.bf16.msra.mxu0 0
        %1617 = vmatprep.subr.bf16.mxu0 0
        %1618 = vmatpush1.bf16.msra.mxu0 0
        %1619 = vmatprep.subr.bf16.mxu0 0
        %1620 = vmatpush1.bf16.msra.mxu0 0
        %1621 = vmatprep.subr.bf16.mxu0 0
        %1622 = vmatpush1.bf16.msra.mxu0 0
        %1623 = vmatprep.mubr.bf16.mxu0 0
        %1624 = vmatmul.mubr.bf16.gmra.mrb[0].mxu0 %v1586
        %v1625 = vpop.f32.mrb[0].mxu0
        %v1626 = vadd.f32 0.0, %v1625
        %v1627 = vpop.f32.mrb[0].mxu0
        %v1628 = vpop.f32.mrb[0].mxu0
        %v1629 = vpop.f32.mrb[0].mxu0
        %1630 = vdwg.mxu0
        %v1631 = vcombine.low %v1488, %v1580
        %v1632 = vcombine.high %v1488, %v1580
        %v1634 = vunpack.c.l.s4 1983009808
        %v1635 = vunpack.c.0.s8 %v1634
        %v1636 = vlaneseq
        %v1637 = vshrl.u32 %v1636, 7
        %v1638 = vsub.s32 %v1635, %v1637
        %v1639 = vrot.slane %v1631, %v1638
        %v1641 = vunpack.c.l.s4 1983009808
        %v1642 = vunpack.c.0.s8 %v1641
        %v1643 = vlaneseq
        %v1644 = vshrl.u32 %v1643, 7
        %v1645 = vsub.s32 %v1642, %v1644
        %v1646 = vrot.slane %v1632, %v1645
        %v1647 = vcombine.low %v1534, %v1626
        %v1648 = vcombine.high %v1534, %v1626
        %v1650 = vunpack.c.l.s4 1983009808
        %v1651 = vunpack.c.0.s8 %v1650
        %v1652 = vlaneseq
        %v1653 = vshrl.u32 %v1652, 7
        %v1654 = vsub.s32 %v1651, %v1653
        %v1655 = vrot.slane %v1647, %v1654
        %v1657 = vunpack.c.l.s4 1983009808
        %v1658 = vunpack.c.0.s8 %v1657
        %v1659 = vlaneseq
        %v1660 = vshrl.u32 %v1659, 7
        %v1661 = vsub.s32 %v1658, %v1660
        %v1662 = vrot.slane %v1648, %v1661
        %v1663 = vcombine.low %v1639, %v1655
        %v1664 = vcombine.high %v1639, %v1655
        %v1666 = vunpack.c.l.s4 1934713408
        %v1667 = vunpack.c.0.s8 %v1666
        %v1668 = vlaneseq
        %v1669 = vshrl.u32 %v1668, 7
        %v1670 = vsub.s32 %v1667, %v1669
        %v1671 = vrot.slane %v1663, %v1670
        %v1673 = vunpack.c.l.s4 1934713408
        %v1674 = vunpack.c.0.s8 %v1673
        %v1675 = vlaneseq
        %v1676 = vshrl.u32 %v1675, 7
        %v1677 = vsub.s32 %v1674, %v1676
        %v1678 = vrot.slane %v1664, %v1677
        %v1679 = vcombine.low %v1646, %v1662
        %v1680 = vcombine.high %v1646, %v1662
        %v1682 = vunpack.c.l.s4 1934713408
        %v1683 = vunpack.c.0.s8 %v1682
        %v1684 = vlaneseq
        %v1685 = vshrl.u32 %v1684, 7
        %v1686 = vsub.s32 %v1683, %v1685
        %v1687 = vrot.slane %v1679, %v1686
        %v1689 = vunpack.c.l.s4 1934713408
        %v1690 = vunpack.c.0.s8 %v1689
        %v1691 = vlaneseq
        %v1692 = vshrl.u32 %v1691, 7
        %v1693 = vsub.s32 %v1690, %v1692
        %v1694 = vrot.slane %v1680, %v1693
        %v1695 = vcombine.high %v1671, 0.0
        %v1696 = vcombine.high %v1678, 0.0
        %v1697 = vcombine.high %v1687, 0.0
        %v1698 = vcombine.high %v1694, 0.0
        %v1699 = vcombine.low %v1671, %v1678
        %v1701 = vunpack.c.l.s4 1983009808
        %v1702 = vunpack.c.0.s8 %v1701
        %v1703 = vlaneseq
        %v1704 = vshrl.u32 %v1703, 7
        %v1705 = vsub.s32 %v1702, %v1704
        %v1706 = vrot.slane %v1699, %v1705
        %v1707 = vcombine.low %v1695, %v1696
        %v1709 = vunpack.c.l.s4 1983009808
        %v1710 = vunpack.c.0.s8 %v1709
        %v1711 = vlaneseq
        %v1712 = vshrl.u32 %v1711, 7
        %v1713 = vsub.s32 %v1710, %v1712
        %v1714 = vrot.slane %v1707, %v1713
        %v1715 = vcombine.low %v1687, %v1694
        %v1717 = vunpack.c.l.s4 1983009808
        %v1718 = vunpack.c.0.s8 %v1717
        %v1719 = vlaneseq
        %v1720 = vshrl.u32 %v1719, 7
        %v1721 = vsub.s32 %v1718, %v1720
        %v1722 = vrot.slane %v1715, %v1721
        %v1723 = vcombine.low %v1697, %v1698
        %v1725 = vunpack.c.l.s4 1983009808
        %v1726 = vunpack.c.0.s8 %v1725
        %v1727 = vlaneseq
        %v1728 = vshrl.u32 %v1727, 7
        %v1729 = vsub.s32 %v1726, %v1728
        %v1730 = vrot.slane %v1723, %v1729
        %v1731 = vcombine.low %v1706, %v1714
        %v1732 = vcombine.high %v1706, %v1714
        %v1734 = vunpack.c.l.s4 1934713408
        %v1735 = vunpack.c.0.s8 %v1734
        %v1736 = vlaneseq
        %v1737 = vshrl.u32 %v1736, 7
        %v1738 = vsub.s32 %v1735, %v1737
        %v1739 = vrot.slane %v1731, %v1738
        %v1741 = vunpack.c.l.s4 1934713408
        %v1742 = vunpack.c.0.s8 %v1741
        %v1743 = vlaneseq
        %v1744 = vshrl.u32 %v1743, 7
        %v1745 = vsub.s32 %v1742, %v1744
        %v1746 = vrot.slane %v1732, %v1745
        %v1747 = vcombine.low %v1722, %v1730
        %v1748 = vcombine.high %v1722, %v1730
        %v1750 = vunpack.c.l.s4 1934713408
        %v1751 = vunpack.c.0.s8 %v1750
        %v1752 = vlaneseq
        %v1753 = vshrl.u32 %v1752, 7
        %v1754 = vsub.s32 %v1751, %v1753
        %v1755 = vrot.slane %v1747, %v1754
        %v1757 = vunpack.c.l.s4 1934713408
        %v1758 = vunpack.c.0.s8 %v1757
        %v1759 = vlaneseq
        %v1760 = vshrl.u32 %v1759, 7
        %v1761 = vsub.s32 %v1758, %v1760
        %v1762 = vrot.slane %v1748, %v1761
        %v1763 = vcombine.low %v1739, %v1755
        %v1764 = vcombine.high %v1739, %v1755
        %v1765 = vcombine.low %v1746, %v1762
        %v1766 = vcombine.high %v1746, %v1762
        %1768 = vrot.lane.b32.xlu0 %v1764, 8
        %v1769 = vpop.permute.xlu0 %1768
        %1772 = vrot.lane.b32.xlu0 %v1765, 16
        %v1773 = vpop.permute.xlu0 %1772
        %1776 = vrot.lane.b32.xlu0 %v1766, 24
        %v1777 = vpop.permute.xlu0 %1776
        %v1779 = vsel %vm1185, %v1763, %v1769
        %vm1780 = vcmask 130048
        %v1781 = vsel %vm1780, %v1779, %v1773
        %vm1782 = vcmask 195584
        %v1783 = vsel %vm1782, %v1781, %v1777
        %v1784 = vpack.c.bf16 %v1783, %v1783
        %v1785 = vld [vmem:[#allocation7] sm:$0xf]
        %v1786 = vld [vmem:[#allocation7 + $0x4] sm:$0xf]
        %v1787 = vld [vmem:[#allocation7 + $0x8] sm:$0xf]
        %v1788 = vld [vmem:[#allocation7 + $0xc] sm:$0xf]
        %v1789 = vld [vmem:[#allocation8] sm:$0x1]
        %v1791 = vlaneseq
        %v1792 = vshrl.u32 %v1791, 7
        %v1793 = vsub.s32 0, %v1792
        %v1794 = vrot.slane %v1789, %v1793
        %v1800 = vunpack.c.l.b16 %v1785
        %v1801 = vunpack.c.l.b16 %v1786
        %v1802 = vunpack.c.l.b16 %v1787
        %v1803 = vunpack.c.l.b16 %v1788
        %v1804 = vpack.c.b16 %v1801, %v1800
        %v1805 = vpack.c.b16 %v1803, %v1802
        %v1809 = vsel %vm632, %v1784, 0
        %1811 = vmatprep.subr.bf16.mxu0 0
        %1812 = vmatpush1.bf16.msra.mxu0 %v1804
        %1813 = vmatprep.subr.bf16.mxu0 0
        %1814 = vmatpush1.bf16.msra.mxu0 %v1805
        %1815 = vmatprep.subr.bf16.mxu0 0
        %1816 = vmatpush1.bf16.msra.mxu0 0
        %1817 = vmatprep.subr.bf16.mxu0 0
        %1818 = vmatpush1.bf16.msra.mxu0 0
        %1819 = vmatprep.subr.bf16.mxu0 0
        %1820 = vmatpush1.bf16.msra.mxu0 0
        %1821 = vmatprep.subr.bf16.mxu0 0
        %1822 = vmatpush1.bf16.msra.mxu0 0
        %1823 = vmatprep.subr.bf16.mxu0 0
        %1824 = vmatpush1.bf16.msra.mxu0 0
        %1825 = vmatprep.subr.bf16.mxu0 0
        %1826 = vmatpush1.bf16.msra.mxu0 0
        %1827 = vmatprep.subr.bf16.mxu0 0
        %1828 = vmatpush1.bf16.msra.mxu0 0
        %1829 = vmatprep.subr.bf16.mxu0 0
        %1830 = vmatpush1.bf16.msra.mxu0 0
        %1831 = vmatprep.subr.bf16.mxu0 0
        %1832 = vmatpush1.bf16.msra.mxu0 0
        %1833 = vmatprep.subr.bf16.mxu0 0
        %1834 = vmatpush1.bf16.msra.mxu0 0
        %1835 = vmatprep.subr.bf16.mxu0 0
        %1836 = vmatpush1.bf16.msra.mxu0 0
        %1837 = vmatprep.subr.bf16.mxu0 0
        %1838 = vmatpush1.bf16.msra.mxu0 0
        %1839 = vmatprep.subr.bf16.mxu0 0
        %1840 = vmatpush1.bf16.msra.mxu0 0
        %1841 = vmatprep.subr.bf16.mxu0 0
        %1842 = vmatpush1.bf16.msra.mxu0 0
        %1843 = vmatprep.mubr.bf16.mxu0 0
        %1844 = vmatmul.mubr.bf16.gmra.mrb[0].mxu0 %v1809
        %v1845 = vpop.f32.mrb[0].mxu0
        %v1846 = vadd.f32 %v1794, %v1845
        %v1847 = vpop.f32.mrb[0].mxu0
        %v1848 = vpop.f32.mrb[0].mxu0
        %v1849 = vpop.f32.mrb[0].mxu0
        %1850 = vdwg.mxu0
        %v1851 = vadd.f32 %v614, %v1846
        %v1852 = vsel %vm632, %v1851, 0.0
        %1853 = vadd.xlane.f32.xlu0 %v1852
        %v1854 = vpop.xlane.xlu0 %1853
        %v1855 = vrcp.pop 32.0
        %v1856 = vmul.f32 %v1854, %v1855
        %v1857 = vsub.f32 %v1851, %v1856
        %v1858 = vmul.f32 %v1857, %v1857
        %v1859 = vsel %vm632, %v1858, 0.0
        %1860 = vadd.xlane.f32.xlu0 %v1859
        %v1861 = vpop.xlane.xlu0 %1860
        %v1862 = vmul.f32 %v1861, %v1855
        %v1863 = vadd.f32 %v1862, 1e-05
        %v1864 = vrsqrt.pop %v1863
        %v1865 = vmul.f32 %v1857, %v1864
        %v1866 = vld [vmem:[#allocation10] sm:$0x1]
        %v1868 = vlaneseq
        %v1869 = vshrl.u32 %v1868, 7
        %v1870 = vsub.s32 0, %v1869
        %v1871 = vrot.slane %v1866, %v1870
        %v1873 = vmul.f32 %v1865, %v1871
        %v1874 = vld [vmem:[#allocation11] sm:$0x1]
        %v1876 = vlaneseq
        %v1877 = vshrl.u32 %v1876, 7
        %v1878 = vsub.s32 0, %v1877
        %v1879 = vrot.slane %v1874, %v1878
        %v1881 = vadd.f32 %v1873, %v1879
        %v1882 = vpack.c.bf16 %v1881, %v1881
        %v1883 = vld [vmem:[#allocation13] sm:$0xf]
        %v1884 = vld [vmem:[#allocation13 + $0x4] sm:$0xf]
        %v1885 = vld [vmem:[#allocation13 + $0x8] sm:$0xf]
        %v1886 = vld [vmem:[#allocation13 + $0xc] sm:$0xf]
        %v1887 = vld [vmem:[#allocation14] sm:$0x1]
        %v1889 = vlaneseq
        %v1890 = vshrl.u32 %v1889, 7
        %v1891 = vsub.s32 0, %v1890
        %v1892 = vrot.slane %v1887, %v1891
        %v1898 = vunpack.c.l.b16 %v1883
        %v1899 = vunpack.c.l.b16 %v1884
        %v1900 = vunpack.c.l.b16 %v1885
        %v1901 = vunpack.c.l.b16 %v1886
        %v1902 = vpack.c.b16 %v1899, %v1898
        %v1903 = vpack.c.b16 %v1901, %v1900
        %v1907 = vsel %vm632, %v1882, 0
        %1909 = vmatprep.subr.bf16.mxu0 0
        %1910 = vmatpush1.bf16.msra.mxu0 %v1902
        %1911 = vmatprep.subr.bf16.mxu0 0
        %1912 = vmatpush1.bf16.msra.mxu0 %v1903
        %1913 = vmatprep.subr.bf16.mxu0 0
        %1914 = vmatpush1.bf16.msra.mxu0 0
        %1915 = vmatprep.subr.bf16.mxu0 0
        %1916 = vmatpush1.bf16.msra.mxu0 0
        %1917 = vmatprep.subr.bf16.mxu0 0
        %1918 = vmatpush1.bf16.msra.mxu0 0
        %1919 = vmatprep.subr.bf16.mxu0 0
        %1920 = vmatpush1.bf16.msra.mxu0 0
        %1921 = vmatprep.subr.bf16.mxu0 0
        %1922 = vmatpush1.bf16.msra.mxu0 0
        %1923 = vmatprep.subr.bf16.mxu0 0
        %1924 = vmatpush1.bf16.msra.mxu0 0
        %1925 = vmatprep.subr.bf16.mxu0 0
        %1926 = vmatpush1.bf16.msra.mxu0 0
        %1927 = vmatprep.subr.bf16.mxu0 0
        %1928 = vmatpush1.bf16.msra.mxu0 0
        %1929 = vmatprep.subr.bf16.mxu0 0
        %1930 = vmatpush1.bf16.msra.mxu0 0
        %1931 = vmatprep.subr.bf16.mxu0 0
        %1932 = vmatpush1.bf16.msra.mxu0 0
        %1933 = vmatprep.subr.bf16.mxu0 0
        %1934 = vmatpush1.bf16.msra.mxu0 0
        %1935 = vmatprep.subr.bf16.mxu0 0
        %1936 = vmatpush1.bf16.msra.mxu0 0
        %1937 = vmatprep.subr.bf16.mxu0 0
        %1938 = vmatpush1.bf16.msra.mxu0 0
        %1939 = vmatprep.subr.bf16.mxu0 0
        %1940 = vmatpush1.bf16.msra.mxu0 0
        %1941 = vmatprep.mubr.bf16.mxu0 0
        %1942 = vmatmul.mubr.bf16.gmra.mrb[0].mxu0 %v1907
        %v1943 = vpop.f32.mrb[0].mxu0
        %v1944 = vadd.f32 %v1892, %v1943
        %v1945 = vpop.f32.mrb[0].mxu0
        %v1946 = vpop.f32.mrb[0].mxu0
        %v1947 = vpop.f32.mrb[0].mxu0
        %1948 = vdwg.mxu0
        %v1949 = vmax.f32 %v1944, 0.0
        %v1950 = vpack.c.bf16 %v1949, %v1949
        %v1951 = vld [vmem:[#allocation16] sm:$0xf]
        %v1952 = vld [vmem:[#allocation16 + $0x4] sm:$0xf]
        %v1953 = vld [vmem:[#allocation16 + $0x8] sm:$0xf]
        %v1954 = vld [vmem:[#allocation16 + $0xc] sm:$0xf]
        %v1955 = vld [vmem:[#allocation16 + $0x10] sm:$0xf]
        %v1956 = vld [vmem:[#allocation16 + $0x14] sm:$0xf]
        %v1957 = vld [vmem:[#allocation16 + $0x18] sm:$0xf]
        %v1958 = vld [vmem:[#allocation16 + $0x1c] sm:$0xf]
        %v1959 = vld [vmem:[#allocation16 + $0x20] sm:$0xf]
        %v1960 = vld [vmem:[#allocation16 + $0x24] sm:$0xf]
        %v1961 = vld [vmem:[#allocation16 + $0x28] sm:$0xf]
        %v1962 = vld [vmem:[#allocation16 + $0x2c] sm:$0xf]
        %v1963 = vld [vmem:[#allocation16 + $0x30] sm:$0xf]
        %v1964 = vld [vmem:[#allocation16 + $0x34] sm:$0xf]
        %v1965 = vld [vmem:[#allocation16 + $0x38] sm:$0xf]
        %v1966 = vld [vmem:[#allocation16 + $0x3c] sm:$0xf]
        %v1967 = vld [vmem:[#allocation17] sm:$0x1]
        %v1969 = vlaneseq
        %v1970 = vshrl.u32 %v1969, 7
        %v1971 = vsub.s32 0, %v1970
        %v1972 = vrot.slane %v1967, %v1971
        %v1990 = vunpack.c.l.b16 %v1951
        %v1991 = vunpack.c.l.b16 %v1952
        %v1992 = vunpack.c.l.b16 %v1953
        %v1993 = vunpack.c.l.b16 %v1954
        %v1994 = vunpack.c.l.b16 %v1955
        %v1995 = vunpack.c.l.b16 %v1956
        %v1996 = vunpack.c.l.b16 %v1957
        %v1997 = vunpack.c.l.b16 %v1958
        %v1998 = vunpack.c.l.b16 %v1959
        %v1999 = vunpack.c.l.b16 %v1960
        %v2000 = vunpack.c.l.b16 %v1961
        %v2001 = vunpack.c.l.b16 %v1962
        %v2002 = vunpack.c.l.b16 %v1963
        %v2003 = vunpack.c.l.b16 %v1964
        %v2004 = vunpack.c.l.b16 %v1965
        %v2005 = vunpack.c.l.b16 %v1966
        %v2006 = vpack.c.b16 %v1991, %v1990
        %v2007 = vpack.c.b16 %v1993, %v1992
        %v2008 = vpack.c.b16 %v1995, %v1994
        %v2009 = vpack.c.b16 %v1997, %v1996
        %v2010 = vpack.c.b16 %v1999, %v1998
        %v2011 = vpack.c.b16 %v2001, %v2000
        %v2012 = vpack.c.b16 %v2003, %v2002
        %v2013 = vpack.c.b16 %v2005, %v2004
        %2022 = vmatprep.subr.bf16.mxu0 0
        %2023 = vmatpush1.bf16.msra.mxu0 %v2006
        %2024 = vmatprep.subr.bf16.mxu0 0
        %2025 = vmatpush1.bf16.msra.mxu0 %v2007
        %2026 = vmatprep.subr.bf16.mxu0 0
        %2027 = vmatpush1.bf16.msra.mxu0 %v2008
        %2028 = vmatprep.subr.bf16.mxu0 0
        %2029 = vmatpush1.bf16.msra.mxu0 %v2009
        %2030 = vmatprep.subr.bf16.mxu0 0
        %2031 = vmatpush1.bf16.msra.mxu0 %v2010
        %2032 = vmatprep.subr.bf16.mxu0 0
        %2033 = vmatpush1.bf16.msra.mxu0 %v2011
        %2034 = vmatprep.subr.bf16.mxu0 0
        %2035 = vmatpush1.bf16.msra.mxu0 %v2012
        %2036 = vmatprep.subr.bf16.mxu0 0
        %2037 = vmatpush1.bf16.msra.mxu0 %v2013
        %2038 = vmatprep.subr.bf16.mxu0 0
        %2039 = vmatpush1.bf16.msra.mxu0 0
        %2040 = vmatprep.subr.bf16.mxu0 0
        %2041 = vmatpush1.bf16.msra.mxu0 0
        %2042 = vmatprep.subr.bf16.mxu0 0
        %2043 = vmatpush1.bf16.msra.mxu0 0
        %2044 = vmatprep.subr.bf16.mxu0 0
        %2045 = vmatpush1.bf16.msra.mxu0 0
        %2046 = vmatprep.subr.bf16.mxu0 0
        %2047 = vmatpush1.bf16.msra.mxu0 0
        %2048 = vmatprep.subr.bf16.mxu0 0
        %2049 = vmatpush1.bf16.msra.mxu0 0
        %2050 = vmatprep.subr.bf16.mxu0 0
        %2051 = vmatpush1.bf16.msra.mxu0 0
        %2052 = vmatprep.subr.bf16.mxu0 0
        %2053 = vmatpush1.bf16.msra.mxu0 0
        %2054 = vmatprep.mubr.bf16.mxu0 0
        %2055 = vmatmul.mubr.bf16.gmra.mrb[0].mxu0 %v1950
        %v2056 = vpop.f32.mrb[0].mxu0
        %v2057 = vadd.f32 %v1972, %v2056
        %v2058 = vpop.f32.mrb[0].mxu0
        %v2059 = vpop.f32.mrb[0].mxu0
        %v2060 = vpop.f32.mrb[0].mxu0
        %2061 = vdwg.mxu0
        %v2062 = vadd.f32 %v1881, %v2057
        %v2063 = vsel %vm632, %v2062, 0.0
        %2064 = vadd.xlane.f32.xlu0 %v2063
        %v2065 = vpop.xlane.xlu0 %2064
        %v2066 = vmul.f32 %v2065, %v1855
        %v2067 = vsub.f32 %v2062, %v2066
        %v2068 = vmul.f32 %v2067, %v2067
        %v2069 = vsel %vm632, %v2068, 0.0
        %2070 = vadd.xlane.f32.xlu0 %v2069
        %v2071 = vpop.xlane.xlu0 %2070
        %v2072 = vmul.f32 %v2071, %v1855
        %v2073 = vadd.f32 %v2072, 1e-05
        %v2074 = vrsqrt.pop %v2073
        %v2075 = vmul.f32 %v2067, %v2074
        %v2076 = vld [vmem:[#allocation19] sm:$0x1]
        %v2078 = vlaneseq
        %v2079 = vshrl.u32 %v2078, 7
        %v2080 = vsub.s32 0, %v2079
        %v2081 = vrot.slane %v2076, %v2080
        %v2083 = vmul.f32 %v2075, %v2081
        %v2084 = vld [vmem:[#allocation20] sm:$0x1]
        %v2086 = vlaneseq
        %v2087 = vshrl.u32 %v2086, 7
        %v2088 = vsub.s32 0, %v2087
        %v2089 = vrot.slane %v2084, %v2088
        %v2091 = vadd.f32 %v2083, %v2089
        %2092 = vst.msk [vmem:[%s605] sm:$0xff] %vm632, %v2091
        %s2093 = sand.u32 %s305, 1
        %s2094 = scalar_lea.sflag [#allocation4], %s2093
        %s2095 = sand.u32 %s305, 1
        %s2096 = smul.addr %s2095, 8
        %s2097 = scalar_lea.vmem [#allocation22], %s2096
        %s2098 = sand.u32 %s331, 1
        %s2099 = scalar_lea.sflag [#allocation24], %s2098
        %s2100 = sand.u32 %s331, 1
        %s2101 = smul.addr %s2100, 16
        %s2102 = scalar_lea.vmem [#allocation23], %s2101
        // Predicated region
        $region117: #{tpu_custom_call.1} parent=67 // pred_check
          %p2103 = pneg %p315
        $region118: #{tpu_custom_call.1} parent=67 // pred_check_branch
          %2105 = sbr.rel (%p2103) target = $region120
        $region119: #{tpu_custom_call.1} parent=67 // pred_region
          %s2107 = ssub.s32 128, 128
          %2108 = vsyncadd %s2094, %s2107
          %s2109 = smul.addr %s40, 128
          %s2110 = scalar_lea.hbm %s12, %s2109
          %s2112 = sshll.u32 %s2097, 4
          %s2113 = int_to_ptr.vmem [resolvable:$true] %s2112
          %2115 = dma.vmem_to_hbm [thread:$0]  %s2113, 128, %s2110, %s2094
        $region120: #{tpu_custom_call.1} parent=67 // pred_fallthru
          _
        // Predicated region
        $region121: #{tpu_custom_call.1} parent=67 // pred_check
          %p2116 = pneg %p341
        $region122: #{tpu_custom_call.1} parent=67 // pred_check_branch
          %2118 = sbr.rel (%p2116) target = $region124
        $region123: #{tpu_custom_call.1} parent=67 // pred_region
          %s2120 = ssub.s32 256, 256
          %2121 = vsyncadd %s2099, %s2120
          %s2122 = smul.addr %s40, 64
          %s2123 = scalar_lea.hbm %s13, %s2122
          %s2124 = sshll.u32 %s2102, 4
          %s2125 = int_to_ptr.vmem [resolvable:$true] %s2124
          %2130 = dma.vmem_to_hbm [thread:$0]  %s2125, 256, %s2123, %s2099, 64, 128, 4
        $region124: #{tpu_custom_call.1} parent=67 // pred_fallthru
          _
      $region68: #{tpu_custom_call.1} parent=5 // pred_fallthru
        _
      %p2131 = scmp.le.s32.totalorder 2, %s35
      // Predicated region
      $region125: #{tpu_custom_call.1} parent=5 // pred_check
        %p2132 = pneg %p2131
      $region126: #{tpu_custom_call.1} parent=5 // pred_check_branch
        %2134 = sbr.rel (%p2132) target = $region128
      $region127: #{tpu_custom_call.1} parent=5 // pred_region
        %s2135 = ssub.s32 %s35, 2
        // Predicated region
        $region129: #{tpu_custom_call.1} parent=127 // pred_check
          %p2136 = pneg %p321
        $region130: #{tpu_custom_call.1} parent=127 // pred_check_branch
          %2138 = sbr.rel (%p2136) target = $region132
        $region131: #{tpu_custom_call.1} parent=127 // pred_region
          %s2139 = sand.u32 %s306, 1
          %s2140 = scalar_lea.sflag [#allocation4], %s2139
          %s2141 = sand.u32 %s306, 1
          %s2142 = smul.addr %s2141, 8
          %s2143 = scalar_lea.vmem [#allocation22], %s2142
          %2144 = dma.done %s2140, 128
        $region132: #{tpu_custom_call.1} parent=127 // pred_fallthru
          _
        // Predicated region
        $region133: #{tpu_custom_call.1} parent=127 // pred_check
          %p2145 = pneg %p347
        $region134: #{tpu_custom_call.1} parent=127 // pred_check_branch
          %2147 = sbr.rel (%p2145) target = $region136
        $region135: #{tpu_custom_call.1} parent=127 // pred_region
          %s2148 = sand.u32 %s332, 1
          %s2149 = scalar_lea.sflag [#allocation24], %s2148
          %s2150 = sand.u32 %s332, 1
          %s2151 = smul.addr %s2150, 16
          %s2152 = scalar_lea.vmem [#allocation23], %s2151
          %2153 = dma.done %s2149, 256
        $region136: #{tpu_custom_call.1} parent=127 // pred_fallthru
          _
      $region128: #{tpu_custom_call.1} parent=5 // pred_fallthru
        _
    $region6: #{tpu_custom_call.1} parent=1 // loop_footer
      %s39 = sadd.s32 1, %s35
    $region7: #{tpu_custom_call.1} parent=1 // loop_footer_branch
      %34 = sbr.rel target = $region3
    $region8: #{tpu_custom_call.1} parent=1 // loop_exit
      _
    %2154 = vsyncpa [#allocation3], 1
    %s2155 = scalar_lea.sflag [#allocation3], 1
    %2156 = vsyncpa %s2155, 1
    %2157 = vsyncpa [#allocation6], 1
    %2158 = vsyncpa [#allocation9], 1
    %2159 = vsyncpa [#allocation12], 1
    %2160 = vsyncpa [#allocation15], 1
    %2161 = vsyncpa [#allocation18], 1
    %2162 = vsyncpa [#allocation21], 1
    %2163 = vsyncpa [#allocation4], 1
    %s2164 = scalar_lea.sflag [#allocation4], 1
    %2165 = vsyncpa %s2164, 1
    %2166 = vsyncpa [#allocation24], 1
    %s2167 = scalar_lea.sflag [#allocation24], 1
    %2168 = vsyncpa %s2167, 1

</llo_original>
